<compile_context>
chip_gen: v7x
topology: tpu7x:2x2x1
jax: 0.10.0
libtpu: 0.0.40
codegen_flags: <defaults>
</compile_context>

<pallas_src>
import math
from functools import partial

import jax
import jax.numpy as jnp
from jax import lax
from jax.experimental import pallas as pl
from jax.experimental.pallas import tpu as pltpu


def _mha_kernel(x_ref, wqkv_ref, bqkv_ref, wp_ref, bp_ref, o_ref, *, heads, head_dim):
    """One grid step = one batch element. Everything stays in VMEM."""
    D = heads * head_dim
    S = x_ref.shape[0]
    inv_norm = 1.0 / math.sqrt(float(head_dim))   # matches PyTorch `d ** 0.5` divisor

    x = x_ref[...]                                                  # [S, D] bf16

    # Fused QKV projection: one wide matmul, fp32 accumulation, one bias add.
    qkv = jnp.dot(x, wqkv_ref[...],
                  preferred_element_type=jnp.float32) + bqkv_ref[...]   # [S, 3D] f32

    # Output-projection bias folded into the accumulator init.
    acc = jnp.broadcast_to(bp_ref[...].astype(jnp.float32), (S, D))     # [S, D] f32

    # TODO(synk): for large S, tile the key axis (softmax here is over the query axis,
    #             so key-column tiles are exactly independent) to bound [S,S] VMEM.
    for h in range(heads):                        # static unrolled loop over heads
        lo = h * head_dim
        q = qkv[:, lo:lo + head_dim]                                # [S, d]
        k = qkv[:, D + lo:D + lo + head_dim]                        # [S, d]
        v = qkv[:, 2 * D + lo:2 * D + lo + head_dim]                # [S, d]

        # q @ k^T without materializing a transpose: contract last dims directly.
        scores = lax.dot_general(
            q.astype(jnp.bfloat16), k.astype(jnp.bfloat16),
            dimension_numbers=(((1,), (1,)), ((), ())),
            preferred_element_type=jnp.float32) * inv_norm          # [Sq, Sk] f32

        # torch.softmax(..., dim=1) on [B, Sq, Sk] normalizes over the QUERY axis,
        # which is axis 0 of the per-batch [Sq, Sk] tile.
        s_max = jnp.max(scores, axis=0, keepdims=True)
        p = jnp.exp(scores - s_max)
        p = p * pl.reciprocal(jnp.sum(p, axis=0, keepdims=True), approx=True)

        # Dropout(p=0.1) -> identity (eval mode).
        # TODO(synk): training-mode dropout (pltpu.prng_random_bits mask) not implemented.

        attn = jnp.dot(p.astype(jnp.bfloat16), v.astype(jnp.bfloat16),
                       preferred_element_type=jnp.float32)          # [S, d] f32

        # Accumulate the final projection per head (== concat(heads) @ Wp) so every
        # intermediate store stays 128-lane dense; no narrow concatenate.
        acc = acc + jnp.dot(attn.astype(jnp.bfloat16),
                            wp_ref[lo:lo + head_dim, :],
                            preferred_element_type=jnp.float32)     # [S, D] f32

    o_ref[...] = acc.astype(o_ref.dtype)


def multi_head_attention(x, params, *, heads):
    """x: [B, S, D] float32.  params: dict of stacked per-head weights (see init_params)."""
    B, S, D = x.shape
    assert D % heads == 0
    d = D // heads

    def fuse_w(w):   # [H, D, d] -> [D, H*d]; head h occupies columns h*d:(h+1)*d
        return jnp.transpose(w, (1, 0, 2)).reshape(D, heads * d)

    def fuse_b(b):   # [H, 1, d] -> [1, H*d]
        return b.reshape(1, heads * d)

    # Fuse per-head projection weights into single wide slabs; cast matmul operands
    # to bf16 (MXU), keep biases in fp32 (added to fp32 accumulations).
    wqkv = jnp.concatenate(
        [fuse_w(params["wq"]), fuse_w(params["wk"]), fuse_w(params["wv"])],
        axis=1).astype(jnp.bfloat16)                                # [D, 3D]
    bqkv = jnp.concatenate(
        [fuse_b(params["bq"]), fuse_b(params["bk"]), fuse_b(params["bv"])],
        axis=1).astype(jnp.float32)                                 # [1, 3D]
    wp = params["wp"].astype(jnp.bfloat16)                          # [D, D]
    bp = params["bp"].astype(jnp.float32)                           # [1, D]
    x_bf = x.astype(jnp.bfloat16)

    # Weights/biases: whole-array VMEM residents (single copy, no double-buffering).
    resident = pl.BlockSpec(memory_space=pltpu.MemorySpace.VMEM)

    return pl.pallas_call(
        partial(_mha_kernel, heads=heads, head_dim=d),
        out_shape=jax.ShapeDtypeStruct((B, S, D), x.dtype),
        grid=(B,),
        in_specs=[
            pl.BlockSpec((pl.Squeezed(), S, D), lambda b: (b, 0, 0)),   # x: one batch / step
            resident,   # wqkv
            resident,   # bqkv
            resident,   # wp
            resident,   # bp
        ],
        out_specs=pl.BlockSpec((pl.Squeezed(), S, D), lambda b: (b, 0, 0)),
        compiler_params=pltpu.CompilerParams(
            dimension_semantics=("parallel",),
            vmem_limit_bytes=32 * 1024 * 1024),
    )(x_bf, wqkv, bqkv, wp, bp)


def init_params(key, dim, heads, dtype=jnp.float32):
    d = dim // heads
    ks = jax.random.split(key, 8)
    scale = 0.02
    return {
        # per-head projections, stored transposed: [H, D, d]; biases [H, 1, d]
        "wq": scale * jax.random.normal(ks[0], (heads, dim, d), dtype),
        "bq": scale * jax.random.normal(ks[1], (heads, 1, d), dtype),
        "wk": scale * jax.random.normal(ks[2], (heads, dim, d), dtype),
        "bk": scale * jax.random.normal(ks[3], (heads, 1, d), dtype),
        "wv": scale * jax.random.normal(ks[4], (heads, dim, d), dtype),
        "bv": scale * jax.random.normal(ks[5], (heads, 1, d), dtype),
        # final projector: [D, D] (transposed) and bias [1, D]
        "wp": scale * jax.random.normal(ks[6], (dim, dim), dtype),
        "bp": scale * jax.random.normal(ks[7], (1, dim), dtype),
    }


def reference(x, params, *, heads):
    """Pure-JAX fp32 reference mirroring the PyTorch forward (eval-mode dropout)."""
    B, S, D = x.shape
    d = D // heads
    outs = []
    for h in range(heads):
        q = x @ params["wq"][h] + params["bq"][h]
        k = x @ params["wk"][h] + params["bk"][h]
        v = x @ params["wv"][h] + params["bv"][h]
        scores = jnp.einsum("bqd,bkd->bqk", q, k) / math.sqrt(float(d))
        p = jax.nn.softmax(scores, axis=1)          # dim=1 == query axis
        outs.append(jnp.einsum("bqk,bkd->bqd", p, v))
    cat = jnp.concatenate(outs, axis=-1)
    return cat @ params["wp"] + params["bp"]


if __name__ == "__main__":
    B, S, DIM, HEADS = 2, 8, 32, 8   # d = 4 per head
    key = jax.random.PRNGKey(0)
    kx, kp = jax.random.split(key)
    x = jax.random.normal(kx, (B, S, DIM), jnp.float32)
    params = init_params(kp, DIM, HEADS)

    out = multi_head_attention(x, params, heads=HEADS)
    out = jax.block_until_ready(out)

    ref = reference(x, params, heads=HEADS)
    assert out.shape == (B, S, DIM)
    max_err = float(jnp.max(jnp.abs(out - ref)))
    # bf16 matmul operands + approx EUP reciprocal -> loosened tolerance vs fp32 reference.
    assert jnp.allclose(out, ref, atol=1e-2, rtol=1e-2), f"mismatch vs reference (max abs err {max_err})"
    print("KERNEL_OK")
</pallas_src>

<mosaic_0001>
module attributes {stable_mosaic.version = 11 : i64} {
  func.func @_mha_kernel(%arg0: i32, %arg1: memref<1x8x32xbf16, #tpu.memory_space<vmem>>, %arg2: memref<32x96xbf16, #tpu.memory_space<vmem>>, %arg3: memref<1x96xf32, #tpu.memory_space<vmem>>, %arg4: memref<32x32xbf16, #tpu.memory_space<vmem>>, %arg5: memref<1x32xf32, #tpu.memory_space<vmem>>, %arg6: memref<1x8x32xf32, #tpu.memory_space<vmem>>) attributes {dimension_semantics = [#tpu.dimension_semantics<parallel>], iteration_bounds = array<i64: 2>, scalar_prefetch = 0 : i64, scratch_operands = 0 : i64, tpu.core_type = #tpu.core_type<tc>, window_params = [{transform_indices = @transform_0, window_bounds = array<i64: 1, 8, 32>}, {pipeline_mode = #tpu.pipeline_mode<synchronous>, transform_indices = @transform_1, window_bounds = array<i64: 32, 96>}, {pipeline_mode = #tpu.pipeline_mode<synchronous>, transform_indices = @transform_2, window_bounds = array<i64: 1, 96>}, {pipeline_mode = #tpu.pipeline_mode<synchronous>, transform_indices = @transform_3, window_bounds = array<i64: 32, 32>}, {pipeline_mode = #tpu.pipeline_mode<synchronous>, transform_indices = @transform_4, window_bounds = array<i64: 1, 32>}, {transform_indices = @transform_5, window_bounds = array<i64: 1, 8, 32>}]} {
    %c0 = arith.constant 0 : index
    %c0_0 = arith.constant 0 : index
    %c0_1 = arith.constant 0 : index
    %0 = vector.load %arg1[%c0, %c0_0, %c0_1] : memref<1x8x32xbf16, #tpu.memory_space<vmem>>, vector<1x8x32xbf16>
    %1 = vector.shape_cast %0 : vector<1x8x32xbf16> to vector<8x32xbf16>
    %c0_2 = arith.constant 0 : index
    %c0_3 = arith.constant 0 : index
    %2 = vector.load %arg2[%c0_2, %c0_3] : memref<32x96xbf16, #tpu.memory_space<vmem>>, vector<32x96xbf16>
    %cst = arith.constant dense<0.000000e+00> : vector<8x96xf32>
    %3 = tpu.matmul %1, %2, %cst {dimension_numbers = #tpu.dot_dimension_numbers<[1], [0], [0], [1], [0, 0, 1, 1], [], []>} : vector<8x32xbf16>, vector<32x96xbf16>, vector<8x96xf32> -> vector<8x96xf32>
    %c0_4 = arith.constant 0 : index
    %c0_5 = arith.constant 0 : index
    %4 = vector.load %arg3[%c0_4, %c0_5] : memref<1x96xf32, #tpu.memory_space<vmem>>, vector<1x96xf32>
    %5 = vector.broadcast %4 : vector<1x96xf32> to vector<8x96xf32>
    %6 = arith.addf %3, %5 : vector<8x96xf32>
    %c0_6 = arith.constant 0 : index
    %c0_7 = arith.constant 0 : index
    %7 = vector.load %arg5[%c0_6, %c0_7] : memref<1x32xf32, #tpu.memory_space<vmem>>, vector<1x32xf32>
    %8 = vector.shape_cast %7 : vector<1x32xf32> to vector<1x32xf32>
    %9 = vector.broadcast %8 : vector<1x32xf32> to vector<8x32xf32>
    %10 = vector.extract_strided_slice %6 {offsets = [0, 0], sizes = [8, 4], strides = [1, 1]} : vector<8x96xf32> to vector<8x4xf32>
    %11 = vector.extract_strided_slice %6 {offsets = [0, 32], sizes = [8, 4], strides = [1, 1]} : vector<8x96xf32> to vector<8x4xf32>
    %12 = vector.extract_strided_slice %6 {offsets = [0, 64], sizes = [8, 4], strides = [1, 1]} : vector<8x96xf32> to vector<8x4xf32>
    %13 = arith.truncf %10 : vector<8x4xf32> to vector<8x4xbf16>
    %14 = arith.truncf %11 : vector<8x4xf32> to vector<8x4xbf16>
    %cst_8 = arith.constant dense<0.000000e+00> : vector<8x8xf32>
    %15 = tpu.matmul %13, %14, %cst_8 {dimension_numbers = #tpu.dot_dimension_numbers<[1], [1], [0], [0], [0, 0, 1, 0], [], []>} : vector<8x4xbf16>, vector<8x4xbf16>, vector<8x8xf32> -> vector<8x8xf32>
    %cst_9 = arith.constant 5.000000e-01 : f32
    %16 = vector.broadcast %cst_9 : f32 to vector<8x8xf32>
    %17 = arith.mulf %15, %16 : vector<8x8xf32>
    %cst_10 = arith.constant dense<0xFF800000> : vector<8xf32>
    %18 = vector.multi_reduction <maximumf>, %17, %cst_10 [0] : vector<8x8xf32> to vector<8xf32>
    %19 = vector.shape_cast %18 : vector<8xf32> to vector<1x8xf32>
    %20 = vector.broadcast %19 : vector<1x8xf32> to vector<8x8xf32>
    %21 = arith.subf %17, %20 : vector<8x8xf32>
    %22 = math.exp %21 : vector<8x8xf32>
    %cst_11 = arith.constant dense<0.000000e+00> : vector<8xf32>
    %23 = vector.multi_reduction <add>, %22, %cst_11 [0] : vector<8x8xf32> to vector<8xf32>
    %24 = vector.shape_cast %23 : vector<8xf32> to vector<1x8xf32>
    %25 = tpu.reciprocal %24 {approx = true} : vector<1x8xf32> -> vector<1x8xf32>
    %26 = vector.broadcast %25 : vector<1x8xf32> to vector<8x8xf32>
    %27 = arith.mulf %22, %26 : vector<8x8xf32>
    %28 = arith.truncf %27 : vector<8x8xf32> to vector<8x8xbf16>
    %29 = arith.truncf %12 : vector<8x4xf32> to vector<8x4xbf16>
    %cst_12 = arith.constant dense<0.000000e+00> : vector<8x4xf32>
    %30 = tpu.matmul %28, %29, %cst_12 {dimension_numbers = #tpu.dot_dimension_numbers<[1], [0], [0], [1], [0, 0, 1, 1], [], []>} : vector<8x8xbf16>, vector<8x4xbf16>, vector<8x4xf32> -> vector<8x4xf32>
    %31 = arith.truncf %30 : vector<8x4xf32> to vector<8x4xbf16>
    %c0_13 = arith.constant 0 : index
    %c0_14 = arith.constant 0 : index
    %32 = vector.load %arg4[%c0_13, %c0_14] : memref<32x32xbf16, #tpu.memory_space<vmem>>, vector<4x32xbf16>
    %cst_15 = arith.constant dense<0.000000e+00> : vector<8x32xf32>
    %33 = tpu.matmul %31, %32, %cst_15 {dimension_numbers = #tpu.dot_dimension_numbers<[1], [0], [0], [1], [0, 0, 1, 1], [], []>} : vector<8x4xbf16>, vector<4x32xbf16>, vector<8x32xf32> -> vector<8x32xf32>
    %34 = arith.addf %9, %33 : vector<8x32xf32>
    %35 = vector.extract_strided_slice %6 {offsets = [0, 4], sizes = [8, 4], strides = [1, 1]} : vector<8x96xf32> to vector<8x4xf32>
    %36 = vector.extract_strided_slice %6 {offsets = [0, 36], sizes = [8, 4], strides = [1, 1]} : vector<8x96xf32> to vector<8x4xf32>
    %37 = vector.extract_strided_slice %6 {offsets = [0, 68], sizes = [8, 4], strides = [1, 1]} : vector<8x96xf32> to vector<8x4xf32>
    %38 = arith.truncf %35 : vector<8x4xf32> to vector<8x4xbf16>
    %39 = arith.truncf %36 : vector<8x4xf32> to vector<8x4xbf16>
    %cst_16 = arith.constant dense<0.000000e+00> : vector<8x8xf32>
    %40 = tpu.matmul %38, %39, %cst_16 {dimension_numbers = #tpu.dot_dimension_numbers<[1], [1], [0], [0], [0, 0, 1, 0], [], []>} : vector<8x4xbf16>, vector<8x4xbf16>, vector<8x8xf32> -> vector<8x8xf32>
    %cst_17 = arith.constant 5.000000e-01 : f32
    %41 = vector.broadcast %cst_17 : f32 to vector<8x8xf32>
    %42 = arith.mulf %40, %41 : vector<8x8xf32>
    %cst_18 = arith.constant dense<0xFF800000> : vector<8xf32>
    %43 = vector.multi_reduction <maximumf>, %42, %cst_18 [0] : vector<8x8xf32> to vector<8xf32>
    %44 = vector.shape_cast %43 : vector<8xf32> to vector<1x8xf32>
    %45 = vector.broadcast %44 : vector<1x8xf32> to vector<8x8xf32>
    %46 = arith.subf %42, %45 : vector<8x8xf32>
    %47 = math.exp %46 : vector<8x8xf32>
    %cst_19 = arith.constant dense<0.000000e+00> : vector<8xf32>
    %48 = vector.multi_reduction <add>, %47, %cst_19 [0] : vector<8x8xf32> to vector<8xf32>
    %49 = vector.shape_cast %48 : vector<8xf32> to vector<1x8xf32>
    %50 = tpu.reciprocal %49 {approx = true} : vector<1x8xf32> -> vector<1x8xf32>
    %51 = vector.broadcast %50 : vector<1x8xf32> to vector<8x8xf32>
    %52 = arith.mulf %47, %51 : vector<8x8xf32>
    %53 = arith.truncf %52 : vector<8x8xf32> to vector<8x8xbf16>
    %54 = arith.truncf %37 : vector<8x4xf32> to vector<8x4xbf16>
    %cst_20 = arith.constant dense<0.000000e+00> : vector<8x4xf32>
    %55 = tpu.matmul %53, %54, %cst_20 {dimension_numbers = #tpu.dot_dimension_numbers<[1], [0], [0], [1], [0, 0, 1, 1], [], []>} : vector<8x8xbf16>, vector<8x4xbf16>, vector<8x4xf32> -> vector<8x4xf32>
    %56 = arith.truncf %55 : vector<8x4xf32> to vector<8x4xbf16>
    %c4 = arith.constant 4 : index
    %c0_21 = arith.constant 0 : index
    %57 = vector.load %arg4[%c4, %c0_21] : memref<32x32xbf16, #tpu.memory_space<vmem>>, vector<4x32xbf16>
    %cst_22 = arith.constant dense<0.000000e+00> : vector<8x32xf32>
    %58 = tpu.matmul %56, %57, %cst_22 {dimension_numbers = #tpu.dot_dimension_numbers<[1], [0], [0], [1], [0, 0, 1, 1], [], []>} : vector<8x4xbf16>, vector<4x32xbf16>, vector<8x32xf32> -> vector<8x32xf32>
    %59 = arith.addf %34, %58 : vector<8x32xf32>
    %60 = vector.extract_strided_slice %6 {offsets = [0, 8], sizes = [8, 4], strides = [1, 1]} : vector<8x96xf32> to vector<8x4xf32>
    %61 = vector.extract_strided_slice %6 {offsets = [0, 40], sizes = [8, 4], strides = [1, 1]} : vector<8x96xf32> to vector<8x4xf32>
    %62 = vector.extract_strided_slice %6 {offsets = [0, 72], sizes = [8, 4], strides = [1, 1]} : vector<8x96xf32> to vector<8x4xf32>
    %63 = arith.truncf %60 : vector<8x4xf32> to vector<8x4xbf16>
    %64 = arith.truncf %61 : vector<8x4xf32> to vector<8x4xbf16>
    %cst_23 = arith.constant dense<0.000000e+00> : vector<8x8xf32>
    %65 = tpu.matmul %63, %64, %cst_23 {dimension_numbers = #tpu.dot_dimension_numbers<[1], [1], [0], [0], [0, 0, 1, 0], [], []>} : vector<8x4xbf16>, vector<8x4xbf16>, vector<8x8xf32> -> vector<8x8xf32>
    %cst_24 = arith.constant 5.000000e-01 : f32
    %66 = vector.broadcast %cst_24 : f32 to vector<8x8xf32>
    %67 = arith.mulf %65, %66 : vector<8x8xf32>
    %cst_25 = arith.constant dense<0xFF800000> : vector<8xf32>
    %68 = vector.multi_reduction <maximumf>, %67, %cst_25 [0] : vector<8x8xf32> to vector<8xf32>
    %69 = vector.shape_cast %68 : vector<8xf32> to vector<1x8xf32>
    %70 = vector.broadcast %69 : vector<1x8xf32> to vector<8x8xf32>
    %71 = arith.subf %67, %70 : vector<8x8xf32>
    %72 = math.exp %71 : vector<8x8xf32>
    %cst_26 = arith.constant dense<0.000000e+00> : vector<8xf32>
    %73 = vector.multi_reduction <add>, %72, %cst_26 [0] : vector<8x8xf32> to vector<8xf32>
    %74 = vector.shape_cast %73 : vector<8xf32> to vector<1x8xf32>
    %75 = tpu.reciprocal %74 {approx = true} : vector<1x8xf32> -> vector<1x8xf32>
    %76 = vector.broadcast %75 : vector<1x8xf32> to vector<8x8xf32>
    %77 = arith.mulf %72, %76 : vector<8x8xf32>
    %78 = arith.truncf %77 : vector<8x8xf32> to vector<8x8xbf16>
    %79 = arith.truncf %62 : vector<8x4xf32> to vector<8x4xbf16>
    %cst_27 = arith.constant dense<0.000000e+00> : vector<8x4xf32>
    %80 = tpu.matmul %78, %79, %cst_27 {dimension_numbers = #tpu.dot_dimension_numbers<[1], [0], [0], [1], [0, 0, 1, 1], [], []>} : vector<8x8xbf16>, vector<8x4xbf16>, vector<8x4xf32> -> vector<8x4xf32>
    %81 = arith.truncf %80 : vector<8x4xf32> to vector<8x4xbf16>
    %c8 = arith.constant 8 : index
    %c0_28 = arith.constant 0 : index
    %82 = vector.load %arg4[%c8, %c0_28] : memref<32x32xbf16, #tpu.memory_space<vmem>>, vector<4x32xbf16>
    %cst_29 = arith.constant dense<0.000000e+00> : vector<8x32xf32>
    %83 = tpu.matmul %81, %82, %cst_29 {dimension_numbers = #tpu.dot_dimension_numbers<[1], [0], [0], [1], [0, 0, 1, 1], [], []>} : vector<8x4xbf16>, vector<4x32xbf16>, vector<8x32xf32> -> vector<8x32xf32>
    %84 = arith.addf %59, %83 : vector<8x32xf32>
    %85 = vector.extract_strided_slice %6 {offsets = [0, 12], sizes = [8, 4], strides = [1, 1]} : vector<8x96xf32> to vector<8x4xf32>
    %86 = vector.extract_strided_slice %6 {offsets = [0, 44], sizes = [8, 4], strides = [1, 1]} : vector<8x96xf32> to vector<8x4xf32>
    %87 = vector.extract_strided_slice %6 {offsets = [0, 76], sizes = [8, 4], strides = [1, 1]} : vector<8x96xf32> to vector<8x4xf32>
    %88 = arith.truncf %85 : vector<8x4xf32> to vector<8x4xbf16>
    %89 = arith.truncf %86 : vector<8x4xf32> to vector<8x4xbf16>
    %cst_30 = arith.constant dense<0.000000e+00> : vector<8x8xf32>
    %90 = tpu.matmul %88, %89, %cst_30 {dimension_numbers = #tpu.dot_dimension_numbers<[1], [1], [0], [0], [0, 0, 1, 0], [], []>} : vector<8x4xbf16>, vector<8x4xbf16>, vector<8x8xf32> -> vector<8x8xf32>
    %cst_31 = arith.constant 5.000000e-01 : f32
    %91 = vector.broadcast %cst_31 : f32 to vector<8x8xf32>
    %92 = arith.mulf %90, %91 : vector<8x8xf32>
    %cst_32 = arith.constant dense<0xFF800000> : vector<8xf32>
    %93 = vector.multi_reduction <maximumf>, %92, %cst_32 [0] : vector<8x8xf32> to vector<8xf32>
    %94 = vector.shape_cast %93 : vector<8xf32> to vector<1x8xf32>
    %95 = vector.broadcast %94 : vector<1x8xf32> to vector<8x8xf32>
    %96 = arith.subf %92, %95 : vector<8x8xf32>
    %97 = math.exp %96 : vector<8x8xf32>
    %cst_33 = arith.constant dense<0.000000e+00> : vector<8xf32>
    %98 = vector.multi_reduction <add>, %97, %cst_33 [0] : vector<8x8xf32> to vector<8xf32>
    %99 = vector.shape_cast %98 : vector<8xf32> to vector<1x8xf32>
    %100 = tpu.reciprocal %99 {approx = true} : vector<1x8xf32> -> vector<1x8xf32>
    %101 = vector.broadcast %100 : vector<1x8xf32> to vector<8x8xf32>
    %102 = arith.mulf %97, %101 : vector<8x8xf32>
    %103 = arith.truncf %102 : vector<8x8xf32> to vector<8x8xbf16>
    %104 = arith.truncf %87 : vector<8x4xf32> to vector<8x4xbf16>
    %cst_34 = arith.constant dense<0.000000e+00> : vector<8x4xf32>
    %105 = tpu.matmul %103, %104, %cst_34 {dimension_numbers = #tpu.dot_dimension_numbers<[1], [0], [0], [1], [0, 0, 1, 1], [], []>} : vector<8x8xbf16>, vector<8x4xbf16>, vector<8x4xf32> -> vector<8x4xf32>
    %106 = arith.truncf %105 : vector<8x4xf32> to vector<8x4xbf16>
    %c12 = arith.constant 12 : index
    %c0_35 = arith.constant 0 : index
    %107 = vector.load %arg4[%c12, %c0_35] : memref<32x32xbf16, #tpu.memory_space<vmem>>, vector<4x32xbf16>
    %cst_36 = arith.constant dense<0.000000e+00> : vector<8x32xf32>
    %108 = tpu.matmul %106, %107, %cst_36 {dimension_numbers = #tpu.dot_dimension_numbers<[1], [0], [0], [1], [0, 0, 1, 1], [], []>} : vector<8x4xbf16>, vector<4x32xbf16>, vector<8x32xf32> -> vector<8x32xf32>
    %109 = arith.addf %84, %108 : vector<8x32xf32>
    %110 = vector.extract_strided_slice %6 {offsets = [0, 16], sizes = [8, 4], strides = [1, 1]} : vector<8x96xf32> to vector<8x4xf32>
    %111 = vector.extract_strided_slice %6 {offsets = [0, 48], sizes = [8, 4], strides = [1, 1]} : vector<8x96xf32> to vector<8x4xf32>
    %112 = vector.extract_strided_slice %6 {offsets = [0, 80], sizes = [8, 4], strides = [1, 1]} : vector<8x96xf32> to vector<8x4xf32>
    %113 = arith.truncf %110 : vector<8x4xf32> to vector<8x4xbf16>
    %114 = arith.truncf %111 : vector<8x4xf32> to vector<8x4xbf16>
    %cst_37 = arith.constant dense<0.000000e+00> : vector<8x8xf32>
    %115 = tpu.matmul %113, %114, %cst_37 {dimension_numbers = #tpu.dot_dimension_numbers<[1], [1], [0], [0], [0, 0, 1, 0], [], []>} : vector<8x4xbf16>, vector<8x4xbf16>, vector<8x8xf32> -> vector<8x8xf32>
    %cst_38 = arith.constant 5.000000e-01 : f32
    %116 = vector.broadcast %cst_38 : f32 to vector<8x8xf32>
    %117 = arith.mulf %115, %116 : vector<8x8xf32>
    %cst_39 = arith.constant dense<0xFF800000> : vector<8xf32>
    %118 = vector.multi_reduction <maximumf>, %117, %cst_39 [0] : vector<8x8xf32> to vector<8xf32>
    %119 = vector.shape_cast %118 : vector<8xf32> to vector<1x8xf32>
    %120 = vector.broadcast %119 : vector<1x8xf32> to vector<8x8xf32>
    %121 = arith.subf %117, %120 : vector<8x8xf32>
    %122 = math.exp %121 : vector<8x8xf32>
    %cst_40 = arith.constant dense<0.000000e+00> : vector<8xf32>
    %123 = vector.multi_reduction <add>, %122, %cst_40 [0] : vector<8x8xf32> to vector<8xf32>
    %124 = vector.shape_cast %123 : vector<8xf32> to vector<1x8xf32>
    %125 = tpu.reciprocal %124 {approx = true} : vector<1x8xf32> -> vector<1x8xf32>
    %126 = vector.broadcast %125 : vector<1x8xf32> to vector<8x8xf32>
    %127 = arith.mulf %122, %126 : vector<8x8xf32>
    %128 = arith.truncf %127 : vector<8x8xf32> to vector<8x8xbf16>
    %129 = arith.truncf %112 : vector<8x4xf32> to vector<8x4xbf16>
    %cst_41 = arith.constant dense<0.000000e+00> : vector<8x4xf32>
    %130 = tpu.matmul %128, %129, %cst_41 {dimension_numbers = #tpu.dot_dimension_numbers<[1], [0], [0], [1], [0, 0, 1, 1], [], []>} : vector<8x8xbf16>, vector<8x4xbf16>, vector<8x4xf32> -> vector<8x4xf32>
    %131 = arith.truncf %130 : vector<8x4xf32> to vector<8x4xbf16>
    %c16 = arith.constant 16 : index
    %c0_42 = arith.constant 0 : index
    %132 = vector.load %arg4[%c16, %c0_42] : memref<32x32xbf16, #tpu.memory_space<vmem>>, vector<4x32xbf16>
    %cst_43 = arith.constant dense<0.000000e+00> : vector<8x32xf32>
    %133 = tpu.matmul %131, %132, %cst_43 {dimension_numbers = #tpu.dot_dimension_numbers<[1], [0], [0], [1], [0, 0, 1, 1], [], []>} : vector<8x4xbf16>, vector<4x32xbf16>, vector<8x32xf32> -> vector<8x32xf32>
    %134 = arith.addf %109, %133 : vector<8x32xf32>
    %135 = vector.extract_strided_slice %6 {offsets = [0, 20], sizes = [8, 4], strides = [1, 1]} : vector<8x96xf32> to vector<8x4xf32>
    %136 = vector.extract_strided_slice %6 {offsets = [0, 52], sizes = [8, 4], strides = [1, 1]} : vector<8x96xf32> to vector<8x4xf32>
    %137 = vector.extract_strided_slice %6 {offsets = [0, 84], sizes = [8, 4], strides = [1, 1]} : vector<8x96xf32> to vector<8x4xf32>
    %138 = arith.truncf %135 : vector<8x4xf32> to vector<8x4xbf16>
    %139 = arith.truncf %136 : vector<8x4xf32> to vector<8x4xbf16>
    %cst_44 = arith.constant dense<0.000000e+00> : vector<8x8xf32>
    %140 = tpu.matmul %138, %139, %cst_44 {dimension_numbers = #tpu.dot_dimension_numbers<[1], [1], [0], [0], [0, 0, 1, 0], [], []>} : vector<8x4xbf16>, vector<8x4xbf16>, vector<8x8xf32> -> vector<8x8xf32>
    %cst_45 = arith.constant 5.000000e-01 : f32
    %141 = vector.broadcast %cst_45 : f32 to vector<8x8xf32>
    %142 = arith.mulf %140, %141 : vector<8x8xf32>
    %cst_46 = arith.constant dense<0xFF800000> : vector<8xf32>
    %143 = vector.multi_reduction <maximumf>, %142, %cst_46 [0] : vector<8x8xf32> to vector<8xf32>
    %144 = vector.shape_cast %143 : vector<8xf32> to vector<1x8xf32>
    %145 = vector.broadcast %144 : vector<1x8xf32> to vector<8x8xf32>
    %146 = arith.subf %142, %145 : vector<8x8xf32>
    %147 = math.exp %146 : vector<8x8xf32>
    %cst_47 = arith.constant dense<0.000000e+00> : vector<8xf32>
    %148 = vector.multi_reduction <add>, %147, %cst_47 [0] : vector<8x8xf32> to vector<8xf32>
    %149 = vector.shape_cast %148 : vector<8xf32> to vector<1x8xf32>
    %150 = tpu.reciprocal %149 {approx = true} : vector<1x8xf32> -> vector<1x8xf32>
    %151 = vector.broadcast %150 : vector<1x8xf32> to vector<8x8xf32>
    %152 = arith.mulf %147, %151 : vector<8x8xf32>
    %153 = arith.truncf %152 : vector<8x8xf32> to vector<8x8xbf16>
    %154 = arith.truncf %137 : vector<8x4xf32> to vector<8x4xbf16>
    %cst_48 = arith.constant dense<0.000000e+00> : vector<8x4xf32>
    %155 = tpu.matmul %153, %154, %cst_48 {dimension_numbers = #tpu.dot_dimension_numbers<[1], [0], [0], [1], [0, 0, 1, 1], [], []>} : vector<8x8xbf16>, vector<8x4xbf16>, vector<8x4xf32> -> vector<8x4xf32>
    %156 = arith.truncf %155 : vector<8x4xf32> to vector<8x4xbf16>
    %c20 = arith.constant 20 : index
    %c0_49 = arith.constant 0 : index
    %157 = vector.load %arg4[%c20, %c0_49] : memref<32x32xbf16, #tpu.memory_space<vmem>>, vector<4x32xbf16>
    %cst_50 = arith.constant dense<0.000000e+00> : vector<8x32xf32>
    %158 = tpu.matmul %156, %157, %cst_50 {dimension_numbers = #tpu.dot_dimension_numbers<[1], [0], [0], [1], [0, 0, 1, 1], [], []>} : vector<8x4xbf16>, vector<4x32xbf16>, vector<8x32xf32> -> vector<8x32xf32>
    %159 = arith.addf %134, %158 : vector<8x32xf32>
    %160 = vector.extract_strided_slice %6 {offsets = [0, 24], sizes = [8, 4], strides = [1, 1]} : vector<8x96xf32> to vector<8x4xf32>
    %161 = vector.extract_strided_slice %6 {offsets = [0, 56], sizes = [8, 4], strides = [1, 1]} : vector<8x96xf32> to vector<8x4xf32>
    %162 = vector.extract_strided_slice %6 {offsets = [0, 88], sizes = [8, 4], strides = [1, 1]} : vector<8x96xf32> to vector<8x4xf32>
    %163 = arith.truncf %160 : vector<8x4xf32> to vector<8x4xbf16>
    %164 = arith.truncf %161 : vector<8x4xf32> to vector<8x4xbf16>
    %cst_51 = arith.constant dense<0.000000e+00> : vector<8x8xf32>
    %165 = tpu.matmul %163, %164, %cst_51 {dimension_numbers = #tpu.dot_dimension_numbers<[1], [1], [0], [0], [0, 0, 1, 0], [], []>} : vector<8x4xbf16>, vector<8x4xbf16>, vector<8x8xf32> -> vector<8x8xf32>
    %cst_52 = arith.constant 5.000000e-01 : f32
    %166 = vector.broadcast %cst_52 : f32 to vector<8x8xf32>
    %167 = arith.mulf %165, %166 : vector<8x8xf32>
    %cst_53 = arith.constant dense<0xFF800000> : vector<8xf32>
    %168 = vector.multi_reduction <maximumf>, %167, %cst_53 [0] : vector<8x8xf32> to vector<8xf32>
    %169 = vector.shape_cast %168 : vector<8xf32> to vector<1x8xf32>
    %170 = vector.broadcast %169 : vector<1x8xf32> to vector<8x8xf32>
    %171 = arith.subf %167, %170 : vector<8x8xf32>
    %172 = math.exp %171 : vector<8x8xf32>
    %cst_54 = arith.constant dense<0.000000e+00> : vector<8xf32>
    %173 = vector.multi_reduction <add>, %172, %cst_54 [0] : vector<8x8xf32> to vector<8xf32>
    %174 = vector.shape_cast %173 : vector<8xf32> to vector<1x8xf32>
    %175 = tpu.reciprocal %174 {approx = true} : vector<1x8xf32> -> vector<1x8xf32>
    %176 = vector.broadcast %175 : vector<1x8xf32> to vector<8x8xf32>
    %177 = arith.mulf %172, %176 : vector<8x8xf32>
    %178 = arith.truncf %177 : vector<8x8xf32> to vector<8x8xbf16>
    %179 = arith.truncf %162 : vector<8x4xf32> to vector<8x4xbf16>
    %cst_55 = arith.constant dense<0.000000e+00> : vector<8x4xf32>
    %180 = tpu.matmul %178, %179, %cst_55 {dimension_numbers = #tpu.dot_dimension_numbers<[1], [0], [0], [1], [0, 0, 1, 1], [], []>} : vector<8x8xbf16>, vector<8x4xbf16>, vector<8x4xf32> -> vector<8x4xf32>
    %181 = arith.truncf %180 : vector<8x4xf32> to vector<8x4xbf16>
    %c24 = arith.constant 24 : index
    %c0_56 = arith.constant 0 : index
    %182 = vector.load %arg4[%c24, %c0_56] : memref<32x32xbf16, #tpu.memory_space<vmem>>, vector<4x32xbf16>
    %cst_57 = arith.constant dense<0.000000e+00> : vector<8x32xf32>
    %183 = tpu.matmul %181, %182, %cst_57 {dimension_numbers = #tpu.dot_dimension_numbers<[1], [0], [0], [1], [0, 0, 1, 1], [], []>} : vector<8x4xbf16>, vector<4x32xbf16>, vector<8x32xf32> -> vector<8x32xf32>
    %184 = arith.addf %159, %183 : vector<8x32xf32>
    %185 = vector.extract_strided_slice %6 {offsets = [0, 28], sizes = [8, 4], strides = [1, 1]} : vector<8x96xf32> to vector<8x4xf32>
    %186 = vector.extract_strided_slice %6 {offsets = [0, 60], sizes = [8, 4], strides = [1, 1]} : vector<8x96xf32> to vector<8x4xf32>
    %187 = vector.extract_strided_slice %6 {offsets = [0, 92], sizes = [8, 4], strides = [1, 1]} : vector<8x96xf32> to vector<8x4xf32>
    %188 = arith.truncf %185 : vector<8x4xf32> to vector<8x4xbf16>
    %189 = arith.truncf %186 : vector<8x4xf32> to vector<8x4xbf16>
    %cst_58 = arith.constant dense<0.000000e+00> : vector<8x8xf32>
    %190 = tpu.matmul %188, %189, %cst_58 {dimension_numbers = #tpu.dot_dimension_numbers<[1], [1], [0], [0], [0, 0, 1, 0], [], []>} : vector<8x4xbf16>, vector<8x4xbf16>, vector<8x8xf32> -> vector<8x8xf32>
    %cst_59 = arith.constant 5.000000e-01 : f32
    %191 = vector.broadcast %cst_59 : f32 to vector<8x8xf32>
    %192 = arith.mulf %190, %191 : vector<8x8xf32>
    %cst_60 = arith.constant dense<0xFF800000> : vector<8xf32>
    %193 = vector.multi_reduction <maximumf>, %192, %cst_60 [0] : vector<8x8xf32> to vector<8xf32>
    %194 = vector.shape_cast %193 : vector<8xf32> to vector<1x8xf32>
    %195 = vector.broadcast %194 : vector<1x8xf32> to vector<8x8xf32>
    %196 = arith.subf %192, %195 : vector<8x8xf32>
    %197 = math.exp %196 : vector<8x8xf32>
    %cst_61 = arith.constant dense<0.000000e+00> : vector<8xf32>
    %198 = vector.multi_reduction <add>, %197, %cst_61 [0] : vector<8x8xf32> to vector<8xf32>
    %199 = vector.shape_cast %198 : vector<8xf32> to vector<1x8xf32>
    %200 = tpu.reciprocal %199 {approx = true} : vector<1x8xf32> -> vector<1x8xf32>
    %201 = vector.broadcast %200 : vector<1x8xf32> to vector<8x8xf32>
    %202 = arith.mulf %197, %201 : vector<8x8xf32>
    %203 = arith.truncf %202 : vector<8x8xf32> to vector<8x8xbf16>
    %204 = arith.truncf %187 : vector<8x4xf32> to vector<8x4xbf16>
    %cst_62 = arith.constant dense<0.000000e+00> : vector<8x4xf32>
    %205 = tpu.matmul %203, %204, %cst_62 {dimension_numbers = #tpu.dot_dimension_numbers<[1], [0], [0], [1], [0, 0, 1, 1], [], []>} : vector<8x8xbf16>, vector<8x4xbf16>, vector<8x4xf32> -> vector<8x4xf32>
    %206 = arith.truncf %205 : vector<8x4xf32> to vector<8x4xbf16>
    %c28 = arith.constant 28 : index
    %c0_63 = arith.constant 0 : index
    %207 = vector.load %arg4[%c28, %c0_63] : memref<32x32xbf16, #tpu.memory_space<vmem>>, vector<4x32xbf16>
    %cst_64 = arith.constant dense<0.000000e+00> : vector<8x32xf32>
    %208 = tpu.matmul %206, %207, %cst_64 {dimension_numbers = #tpu.dot_dimension_numbers<[1], [0], [0], [1], [0, 0, 1, 1], [], []>} : vector<8x4xbf16>, vector<4x32xbf16>, vector<8x32xf32> -> vector<8x32xf32>
    %209 = arith.addf %184, %208 : vector<8x32xf32>
    %c0_65 = arith.constant 0 : index
    %c0_66 = arith.constant 0 : index
    %c0_67 = arith.constant 0 : index
    %210 = vector.load %arg6[%c0_65, %c0_66, %c0_67] : memref<1x8x32xf32, #tpu.memory_space<vmem>>, vector<1x8x32xf32>
    %211 = vector.shape_cast %210 : vector<1x8x32xf32> to vector<8x32xf32>
    %212 = vector.shape_cast %209 : vector<8x32xf32> to vector<1x8x32xf32>
    tpu.vector_store %arg6[%c0_65, %c0_66, %c0_67], %212 {strides = array<i32>} : memref<1x8x32xf32, #tpu.memory_space<vmem>>, vector<1x8x32xf32>,
    return
  }
  func.func @transform_0(%arg0: i32) -> (i32, i32, i32) {
    %c0_i32 = arith.constant 0 : i32
    %c0_i32_0 = arith.constant 0 : i32
    %c0_i32_1 = arith.constant 0 : i32
    return %arg0, %c0_i32, %c0_i32_0 : i32, i32, i32
  }
  func.func @transform_1(%arg0: i32) -> (i32, i32) {
    %c0_i32 = arith.constant 0 : i32
    %c0_i32_0 = arith.constant 0 : i32
    %c0_i32_1 = arith.constant 0 : i32
    return %c0_i32, %c0_i32_0 : i32, i32
  }
  func.func @transform_2(%arg0: i32) -> (i32, i32) {
    %c0_i32 = arith.constant 0 : i32
    %c0_i32_0 = arith.constant 0 : i32
    %c0_i32_1 = arith.constant 0 : i32
    return %c0_i32, %c0_i32_0 : i32, i32
  }
  func.func @transform_3(%arg0: i32) -> (i32, i32) {
    %c0_i32 = arith.constant 0 : i32
    %c0_i32_0 = arith.constant 0 : i32
    %c0_i32_1 = arith.constant 0 : i32
    return %c0_i32, %c0_i32_0 : i32, i32
  }
  func.func @transform_4(%arg0: i32) -> (i32, i32) {
    %c0_i32 = arith.constant 0 : i32
    %c0_i32_0 = arith.constant 0 : i32
    %c0_i32_1 = arith.constant 0 : i32
    return %c0_i32, %c0_i32_0 : i32, i32
  }
  func.func @transform_5(%arg0: i32) -> (i32, i32, i32) {
    %c0_i32 = arith.constant 0 : i32
    %c0_i32_0 = arith.constant 0 : i32
    %c0_i32_1 = arith.constant 0 : i32
    return %arg0, %c0_i32, %c0_i32_0 : i32, i32, i32
  }
}

</mosaic_0001>

<llo_original>
// kernel: tpu_custom_call.1
$region0: #{tpu_custom_call.1}
  #allocation0 [shape = 'u32[]', space=smem, size = 0x4, offset = 0x4, fixed_abs, tag = 'smem constant byte address 0x4 - core index']
  #allocation1 [shape = 'u32[144,128]{1,0:T(1,128)}', space=vmem, size = 0x12000, scoped, tag = 'internal scratch']
  %s0 = inlined_call_operand.hbm [shape: bf16[2,8,32], index: 0, kind: input, shape index: {}]
  %s1 = inlined_call_operand.hbm [shape: bf16[32,96], index: 1, kind: input, shape index: {}]
  %s2 = inlined_call_operand.vmem [shape: f32[1,96], index: 2, kind: input, shape index: {}]
  %s3 = inlined_call_operand.hbm [shape: bf16[32,32], index: 3, kind: input, shape index: {}]
  %s4 = inlined_call_operand.vmem [shape: f32[1,32], index: 4, kind: input, shape index: {}]
  %s5 = inlined_call_operand.hbm [shape: f32[2,8,32], index: 5, kind: output, shape index: {}]
  %s6 = sld [smem:[#allocation0]]
  $region65: #{tpu_custom_call.1} parent=0
    _
  %s8 = ssub.s32 1, %s6
  %s9 = scalar_select 0, %s8, %s6
  $region1: #{tpu_custom_call.1} parent=0
    #allocation2 [shape = 'u8[4096]{0}', space=vmem, size = 0x1000, scoped, tag = 'input window, operand 0']
    #allocation3 [shape = 's32[2]{0}', space=sflag, size = 0x8, scoped, tag = 'scoped memory for tpu_custom_call.1']
    #allocation4 [shape = 's32[2]{0}', space=sflag, size = 0x8, scoped, tag = 'scoped memory for tpu_custom_call.1']
    #allocation5 [shape = 'u8[8192]{0}', space=vmem, size = 0x2000, scoped, tag = 'input window, operand 1, single buffered']
    #allocation6 [shape = 's32[1]{0}', space=sflag, size = 0x4, scoped, tag = 'scoped memory for tpu_custom_call.1']
    #allocation7 [shape = 'u8[8192]{0}', space=vmem, size = 0x2000, scoped, tag = 'input window, operand 3, single buffered']
    #allocation8 [shape = 'u8[8192]{0}', space=vmem, size = 0x2000, scoped, tag = 'output window, operand 0']
    %10 = vsyncpa [#allocation3], 0
    %s11 = scalar_lea.sflag [#allocation3], 1
    %12 = vsyncpa %s11, 0
    %13 = vsyncpa [#allocation6], 0
    %14 = vsyncpa [#allocation4], 0
    %s15 = scalar_lea.sflag [#allocation4], 1
    %16 = vsyncpa %s15, 0
    loop: start=0, step=1, limit=4
    $region2: #{tpu_custom_call.1} parent=1 // loop_pre_header
      _
    $region3: #{tpu_custom_call.1} parent=1 // loop_header
      %s18 = sphi 0, %s22
      %p19 = scmp.ge.s32.totalorder %s18, 4
      %s28 = sphi 0, %s30
      %s31 = sphi 0, %s28
      %s32 = sphi 0, %s31
      %s48 = sphi 0, %s32
      %s52 = sphi 0, %s52
      %s54 = sphi 0, %s52
      %s55 = sphi 0, %s54
      %s69 = sphi 0, %s55
      %s73 = sphi 0, %s73
      %s75 = sphi 0, %s73
      %s76 = sphi 0, %s75
      %s90 = sphi 0, %s76
      %s94 = sphi 0, %s94
      %s96 = sphi 0, %s94
      %s97 = sphi 0, %s96
      %s111 = sphi 0, %s97
      %s115 = sphi 0, %s115
      %s117 = sphi 0, %s115
      %s118 = sphi 0, %s117
      %s132 = sphi 0, %s118
      %s138 = sphi 0, %s140
      %s141 = sphi 0, %s138
      %s142 = sphi 0, %s141
      %s158 = sphi 0, %s142
    $region4: #{tpu_custom_call.1} parent=1 // loop_header_branch
      %21 = sbr.rel (%p19) target = $region8
    $region5: #{tpu_custom_call.1} parent=1 // loop_body
      %s23 = ssub.s32 %s18, 1
      %s24 = ssub.s32 %s18, 2
      %s25 = sadd.s32 %s18, 1
      %s26 = ssub.s32 %s18, %s25
      %p27 = scmp.eq.s32.totalorder %s26, 0
      %s29 = sadd.s32 %s28, 1
      %s30 = scalar_select %p27, %s28, %s29
      %p33 = pneg %p27
      %p34 = scmp.eq.s32.totalorder %s18, 1
      %p35 = por %p33, %p34
      %p36 = scmp.ne.s32.totalorder %s28, %s31
      %p37 = scmp.eq.s32.totalorder %s18, 0
      %p38 = por %p36, %p37
      %p39 = scmp.ne.s32.totalorder %s28, %s31
      %p40 = scmp.eq.s32.totalorder %s23, 1
      %p41 = por %p39, %p40
      %p42 = scmp.ne.s32.totalorder %s31, %s32
      %p43 = scmp.eq.s32.totalorder %s23, 0
      %p44 = por %p42, %p43
      %p45 = scmp.ne.s32.totalorder %s31, %s32
      %p46 = scmp.eq.s32.totalorder %s24, 1
      %p47 = por %p45, %p46
      %p49 = scmp.ne.s32.totalorder %s32, %s48
      %p50 = scmp.eq.s32.totalorder %s24, 0
      %p51 = por %p49, %p50
      %s53 = sadd.s32 %s52, 1
      %p56 = scmp.eq.s32.totalorder %s18, 1
      %p57 = scmp.ne.s32.totalorder %s52, %s54
      %p58 = scmp.eq.s32.totalorder %s18, 0
      %p59 = por %p57, %p58
      %p60 = scmp.ne.s32.totalorder %s52, %s54
      %p61 = scmp.eq.s32.totalorder %s23, 1
      %p62 = por %p60, %p61
      %p63 = scmp.ne.s32.totalorder %s54, %s55
      %p64 = scmp.eq.s32.totalorder %s23, 0
      %p65 = por %p63, %p64
      %p66 = scmp.ne.s32.totalorder %s54, %s55
      %p67 = scmp.eq.s32.totalorder %s24, 1
      %p68 = por %p66, %p67
      %p70 = scmp.ne.s32.totalorder %s55, %s69
      %p71 = scmp.eq.s32.totalorder %s24, 0
      %p72 = por %p70, %p71
      %s74 = sadd.s32 %s73, 1
      %p77 = scmp.eq.s32.totalorder %s18, 1
      %p78 = scmp.ne.s32.totalorder %s73, %s75
      %p79 = scmp.eq.s32.totalorder %s18, 0
      %p80 = por %p78, %p79
      %p81 = scmp.ne.s32.totalorder %s73, %s75
      %p82 = scmp.eq.s32.totalorder %s23, 1
      %p83 = por %p81, %p82
      %p84 = scmp.ne.s32.totalorder %s75, %s76
      %p85 = scmp.eq.s32.totalorder %s23, 0
      %p86 = por %p84, %p85
      %p87 = scmp.ne.s32.totalorder %s75, %s76
      %p88 = scmp.eq.s32.totalorder %s24, 1
      %p89 = por %p87, %p88
      %p91 = scmp.ne.s32.totalorder %s76, %s90
      %p92 = scmp.eq.s32.totalorder %s24, 0
      %p93 = por %p91, %p92
      %s95 = sadd.s32 %s94, 1
      %p98 = scmp.eq.s32.totalorder %s18, 1
      %p99 = scmp.ne.s32.totalorder %s94, %s96
      %p100 = scmp.eq.s32.totalorder %s18, 0
      %p101 = por %p99, %p100
      %p102 = scmp.ne.s32.totalorder %s94, %s96
      %p103 = scmp.eq.s32.totalorder %s23, 1
      %p104 = por %p102, %p103
      %p105 = scmp.ne.s32.totalorder %s96, %s97
      %p106 = scmp.eq.s32.totalorder %s23, 0
      %p107 = por %p105, %p106
      %p108 = scmp.ne.s32.totalorder %s96, %s97
      %p109 = scmp.eq.s32.totalorder %s24, 1
      %p110 = por %p108, %p109
      %p112 = scmp.ne.s32.totalorder %s97, %s111
      %p113 = scmp.eq.s32.totalorder %s24, 0
      %p114 = por %p112, %p113
      %s116 = sadd.s32 %s115, 1
      %p119 = scmp.eq.s32.totalorder %s18, 1
      %p120 = scmp.ne.s32.totalorder %s115, %s117
      %p121 = scmp.eq.s32.totalorder %s18, 0
      %p122 = por %p120, %p121
      %p123 = scmp.ne.s32.totalorder %s115, %s117
      %p124 = scmp.eq.s32.totalorder %s23, 1
      %p125 = por %p123, %p124
      %p126 = scmp.ne.s32.totalorder %s117, %s118
      %p127 = scmp.eq.s32.totalorder %s23, 0
      %p128 = por %p126, %p127
      %p129 = scmp.ne.s32.totalorder %s117, %s118
      %p130 = scmp.eq.s32.totalorder %s24, 1
      %p131 = por %p129, %p130
      %p133 = scmp.ne.s32.totalorder %s118, %s132
      %p134 = scmp.eq.s32.totalorder %s24, 0
      %p135 = por %p133, %p134
      %s136 = ssub.s32 %s18, %s25
      %p137 = scmp.eq.s32.totalorder %s136, 0
      %s139 = sadd.s32 %s138, 1
      %s140 = scalar_select %p137, %s138, %s139
      %p143 = pneg %p137
      %p144 = scmp.eq.s32.totalorder %s18, 1
      %p145 = por %p143, %p144
      %p146 = scmp.ne.s32.totalorder %s138, %s141
      %p147 = scmp.eq.s32.totalorder %s18, 0
      %p148 = por %p146, %p147
      %p149 = scmp.ne.s32.totalorder %s138, %s141
      %p150 = scmp.eq.s32.totalorder %s23, 1
      %p151 = por %p149, %p150
      %p152 = scmp.ne.s32.totalorder %s141, %s142
      %p153 = scmp.eq.s32.totalorder %s23, 0
      %p154 = por %p152, %p153
      %p155 = scmp.ne.s32.totalorder %s141, %s142
      %p156 = scmp.eq.s32.totalorder %s24, 1
      %p157 = por %p155, %p156
      %p159 = scmp.ne.s32.totalorder %s142, %s158
      %p160 = scmp.eq.s32.totalorder %s24, 0
      %p161 = por %p159, %p160
      %p162 = scmp.le.s32.totalorder 1, %s18
      %p163 = scmp.lt.s32.totalorder %s18, 3
      %p164 = pnand %p162, %p163
      %p165 = pneg %p164
      // Predicated region
      $region9: #{tpu_custom_call.1} parent=5 // pred_check
        _
      $region10: #{tpu_custom_call.1} parent=5 // pred_check_branch
        %167 = sbr.rel (%p164) target = $region12
      $region11: #{tpu_custom_call.1} parent=5 // pred_region
        %s168 = ssub.s32 %s18, 1
        // Predicated region
        $region13: #{tpu_custom_call.1} parent=11 // pred_check
          %p169 = pneg %p65
        $region14: #{tpu_custom_call.1} parent=11 // pred_check_branch
          %171 = sbr.rel (%p169) target = $region16
        $region15: #{tpu_custom_call.1} parent=11 // pred_region
          %s173 = ssub.s32 256, 256
          %174 = vsyncadd [#allocation6], %s173
          %s175 = sshll.u32 [#allocation5], 4
          %s176 = int_to_ptr.vmem [resolvable:$true] %s175
          %181 = dma.hbm_to_vmem [thread:$0]  %s1, 256, %s176, [#allocation6], 64, 64, 4
        $region16: #{tpu_custom_call.1} parent=11 // pred_fallthru
          _
        // Predicated region
        $region17: #{tpu_custom_call.1} parent=11 // pred_check
          %p182 = pneg %p86
        $region18: #{tpu_custom_call.1} parent=11 // pred_check_branch
          %184 = sbr.rel (%p182) target = $region20
        $region19: #{tpu_custom_call.1} parent=11 // pred_region
          _
        $region20: #{tpu_custom_call.1} parent=11 // pred_fallthru
          _
        // Predicated region
        $region21: #{tpu_custom_call.1} parent=11 // pred_check
          %p185 = pneg %p107
        $region22: #{tpu_custom_call.1} parent=11 // pred_check_branch
          %187 = sbr.rel (%p185) target = $region24
        $region23: #{tpu_custom_call.1} parent=11 // pred_region
          %s189 = ssub.s32 256, 256
          %190 = vsyncadd [#allocation6], %s189
          %s191 = sshll.u32 [#allocation7], 4
          %s192 = int_to_ptr.vmem [resolvable:$true] %s191
          %197 = dma.hbm_to_vmem [thread:$0]  %s3, 256, %s192, [#allocation6], 64, 64, 4
        $region24: #{tpu_custom_call.1} parent=11 // pred_fallthru
          _
        // Predicated region
        $region25: #{tpu_custom_call.1} parent=11 // pred_check
          %p198 = pneg %p128
        $region26: #{tpu_custom_call.1} parent=11 // pred_check_branch
          %200 = sbr.rel (%p198) target = $region28
        $region27: #{tpu_custom_call.1} parent=11 // pred_region
          _
        $region28: #{tpu_custom_call.1} parent=11 // pred_fallthru
          _
      $region12: #{tpu_custom_call.1} parent=5 // pred_fallthru
        _
      %p201 = scmp.lt.s32.totalorder %s18, 2
      // Predicated region
      $region29: #{tpu_custom_call.1} parent=5 // pred_check
        %p202 = pneg %p201
      $region30: #{tpu_custom_call.1} parent=5 // pred_check_branch
        %204 = sbr.rel (%p202) target = $region32
      $region31: #{tpu_custom_call.1} parent=5 // pred_region
        // Predicated region
        $region33: #{tpu_custom_call.1} parent=31 // pred_check
          %p205 = pneg %p38
        $region34: #{tpu_custom_call.1} parent=31 // pred_check_branch
          %207 = sbr.rel (%p205) target = $region36
        $region35: #{tpu_custom_call.1} parent=31 // pred_region
          %s208 = sand.u32 %s28, 1
          %s209 = scalar_lea.sflag [#allocation3], %s208
          %s210 = sand.u32 %s28, 1
          %s211 = smul.addr %s210, 4
          %s212 = scalar_lea.vmem [#allocation2], %s211
          %s214 = ssub.s32 64, 64
          %215 = vsyncadd %s209, %s214
          %s216 = smul.addr %s18, 64
          %s217 = scalar_lea.hbm %s0, %s216
          %s219 = sshll.u32 %s212, 4
          %s220 = int_to_ptr.vmem [resolvable:$true] %s219
          %222 = dma.hbm_to_vmem [thread:$0]  %s217, 64, %s220, %s209
        $region36: #{tpu_custom_call.1} parent=31 // pred_fallthru
          _
      $region32: #{tpu_custom_call.1} parent=5 // pred_fallthru
        _
      %p223 = scmp.le.s32.totalorder 1, %s18
      %p224 = scmp.lt.s32.totalorder %s18, 3
      %p225 = pnand %p223, %p224
      %p226 = pneg %p225
      // Predicated region
      $region37: #{tpu_custom_call.1} parent=5 // pred_check
        _
      $region38: #{tpu_custom_call.1} parent=5 // pred_check_branch
        %228 = sbr.rel (%p225) target = $region40
      $region39: #{tpu_custom_call.1} parent=5 // pred_region
        %s229 = ssub.s32 %s18, 1
        %s230 = sand.u32 %s31, 1
        %s231 = scalar_lea.sflag [#allocation3], %s230
        %s232 = sand.u32 %s31, 1
        %s233 = smul.addr %s232, 4
        %s234 = scalar_lea.vmem [#allocation2], %s233
        // Predicated region
        $region41: #{tpu_custom_call.1} parent=39 // pred_check
          %p235 = pneg %p44
        $region42: #{tpu_custom_call.1} parent=39 // pred_check_branch
          %237 = sbr.rel (%p235) target = $region44
        $region43: #{tpu_custom_call.1} parent=39 // pred_region
          %238 = dma.done %s231, 64
        $region44: #{tpu_custom_call.1} parent=39 // pred_fallthru
          _
        // Predicated region
        $region45: #{tpu_custom_call.1} parent=39 // pred_check
          %p239 = pneg %p65
        $region46: #{tpu_custom_call.1} parent=39 // pred_check_branch
          %241 = sbr.rel (%p239) target = $region48
        $region47: #{tpu_custom_call.1} parent=39 // pred_region
          %242 = dma.done [#allocation6], 256
        $region48: #{tpu_custom_call.1} parent=39 // pred_fallthru
          _
        // Predicated region
        $region49: #{tpu_custom_call.1} parent=39 // pred_check
          %p243 = pneg %p107
        $region50: #{tpu_custom_call.1} parent=39 // pred_check_branch
          %245 = sbr.rel (%p243) target = $region52
        $region51: #{tpu_custom_call.1} parent=39 // pred_region
          %246 = dma.done [#allocation6], 256
        $region52: #{tpu_custom_call.1} parent=39 // pred_fallthru
          _
        %s247 = sand.u32 %s31, 1
        %s248 = scalar_lea.sflag [#allocation3], %s247
        %s249 = sand.u32 %s31, 1
        %s250 = smul.addr %s249, 4
        %s251 = scalar_lea.vmem [#allocation2], %s250
        %p252 = pneg %p44
        %p253 = pneg %p41
        %p254 = pneg %p65
        %p255 = pneg %p62
        %p256 = pneg %p86
        %p257 = pneg %p83
        %p258 = pneg %p107
        %p259 = pneg %p104
        %p260 = pneg %p128
        %p261 = pneg %p125
        %p262 = pneg %p154
        %p263 = pneg %p151
        %s264 = sand.u32 %s141, 1
        %s265 = scalar_lea.sflag [#allocation4], %s264
        %s266 = sand.u32 %s141, 1
        %s267 = smul.addr %s266, 8
        %s268 = scalar_lea.vmem [#allocation8], %s267
        %v270 = vld [vmem:[%s234] sm:$0xf]
        %v271 = vld [vmem:[#allocation5] sm:$0xf]
        %v272 = vld [vmem:[#allocation5 + $0x4] sm:$0xf]
        %v273 = vld [vmem:[#allocation5 + $0x8] sm:$0xf]
        %v274 = vld [vmem:[#allocation5 + $0xc] sm:$0xf]
        %v275 = vld [vmem:[%s2] sm:$0x1]
        %v277 = vlaneseq
        %v278 = vshrl.u32 %v277, 7
        %v279 = vsub.s32 0, %v278
        %v280 = vrot.slane %v275, %v279
        %v286 = vunpack.c.l.b16 %v271
        %v287 = vunpack.c.l.b16 %v272
        %v288 = vunpack.c.l.b16 %v273
        %v289 = vunpack.c.l.b16 %v274
        %v290 = vpack.c.b16 %v287, %v286
        %v291 = vpack.c.b16 %v289, %v288
        %vm294 = vcmask 261120
        %v296 = vsel %vm294, %v270, 0
        %298 = vmatprep.subr.bf16.mxu0 0
        %299 = vmatpush1.bf16.msra.mxu0 %v290
        %300 = vmatprep.subr.bf16.mxu0 0
        %301 = vmatpush1.bf16.msra.mxu0 %v291
        %302 = vmatprep.subr.bf16.mxu0 0
        %303 = vmatpush1.bf16.msra.mxu0 0
        %304 = vmatprep.subr.bf16.mxu0 0
        %305 = vmatpush1.bf16.msra.mxu0 0
        %306 = vmatprep.subr.bf16.mxu0 0
        %307 = vmatpush1.bf16.msra.mxu0 0
        %308 = vmatprep.subr.bf16.mxu0 0
        %309 = vmatpush1.bf16.msra.mxu0 0
        %310 = vmatprep.subr.bf16.mxu0 0
        %311 = vmatpush1.bf16.msra.mxu0 0
        %312 = vmatprep.subr.bf16.mxu0 0
        %313 = vmatpush1.bf16.msra.mxu0 0
        %314 = vmatprep.subr.bf16.mxu0 0
        %315 = vmatpush1.bf16.msra.mxu0 0
        %316 = vmatprep.subr.bf16.mxu0 0
        %317 = vmatpush1.bf16.msra.mxu0 0
        %318 = vmatprep.subr.bf16.mxu0 0
        %319 = vmatpush1.bf16.msra.mxu0 0
        %320 = vmatprep.subr.bf16.mxu0 0
        %321 = vmatpush1.bf16.msra.mxu0 0
        %322 = vmatprep.subr.bf16.mxu0 0
        %323 = vmatpush1.bf16.msra.mxu0 0
        %324 = vmatprep.subr.bf16.mxu0 0
        %325 = vmatpush1.bf16.msra.mxu0 0
        %326 = vmatprep.subr.bf16.mxu0 0
        %327 = vmatpush1.bf16.msra.mxu0 0
        %328 = vmatprep.subr.bf16.mxu0 0
        %329 = vmatpush1.bf16.msra.mxu0 0
        %330 = vmatprep.mubr.bf16.mxu0 0
        %331 = vmatmul.mubr.bf16.gmra.mrb[0].mxu0 %v296
        %v332 = vpop.f32.mrb[0].mxu0
        %v333 = vadd.f32 %v280, %v332
        %v334 = vpop.f32.mrb[0].mxu0
        %v335 = vpop.f32.mrb[0].mxu0
        %v336 = vpop.f32.mrb[0].mxu0
        %337 = vdwg.mxu0
        %v338 = vld [vmem:[%s4] sm:$0x1]
        %v340 = vlaneseq
        %v341 = vshrl.u32 %v340, 7
        %v342 = vsub.s32 0, %v341
        %v343 = vrot.slane %v338, %v342
        %v345 = vpack.c.bf16 %v333, %v333
        %347 = vrot.lane.b32.xlu0 %v345, 96
        %v348 = vpop.permute.xlu0 %347
        %vm349 = vcmask 31744
        %v351 = vsel %vm349, %v345, 0
        %v354 = vsel %vm349, %v348, 0
        %356 = vmatprep.subr.bf16.mxu0 0
        %357 = vmatpush1.bf16.xpose.msra.mxu0 %v354
        %358 = vmatprep.subr.bf16.mxu0 0
        %359 = vmatpush1.bf16.xpose.msra.mxu0 0
        %360 = vmatprep.subr.bf16.mxu0 0
        %361 = vmatpush1.bf16.xpose.msra.mxu0 0
        %362 = vmatprep.subr.bf16.mxu0 0
        %363 = vmatpush1.bf16.xpose.msra.mxu0 0
        %364 = vmatprep.subr.bf16.mxu0 0
        %365 = vmatpush1.bf16.xpose.msra.mxu0 0
        %366 = vmatprep.subr.bf16.mxu0 0
        %367 = vmatpush1.bf16.xpose.msra.mxu0 0
        %368 = vmatprep.subr.bf16.mxu0 0
        %369 = vmatpush1.bf16.xpose.msra.mxu0 0
        %370 = vmatprep.subr.bf16.mxu0 0
        %371 = vmatpush1.bf16.xpose.msra.mxu0 0
        %372 = vmatprep.subr.bf16.mxu0 0
        %373 = vmatpush1.bf16.xpose.msra.mxu0 0
        %374 = vmatprep.subr.bf16.mxu0 0
        %375 = vmatpush1.bf16.xpose.msra.mxu0 0
        %376 = vmatprep.subr.bf16.mxu0 0
        %377 = vmatpush1.bf16.xpose.msra.mxu0 0
        %378 = vmatprep.subr.bf16.mxu0 0
        %379 = vmatpush1.bf16.xpose.msra.mxu0 0
        %380 = vmatprep.subr.bf16.mxu0 0
        %381 = vmatpush1.bf16.xpose.msra.mxu0 0
        %382 = vmatprep.subr.bf16.mxu0 0
        %383 = vmatpush1.bf16.xpose.msra.mxu0 0
        %384 = vmatprep.subr.bf16.mxu0 0
        %385 = vmatpush1.bf16.xpose.msra.mxu0 0
        %386 = vmatprep.subr.bf16.mxu0 0
        %387 = vmatpush1.bf16.xpose.msra.mxu0 0
        %388 = vmatprep.mubr.bf16.mxu0 0
        %389 = vmatmul.mubr.bf16.gmra.mrb[0].mxu0 %v351
        %v390 = vpop.f32.mrb[0].mxu0
        %v391 = vadd.f32 0.0, %v390
        %v392 = vpop.f32.mrb[0].mxu0
        %v393 = vpop.f32.mrb[0].mxu0
        %v394 = vpop.f32.mrb[0].mxu0
        %395 = vdwg.mxu0
        %v396 = vmul.f32 %v391, 0.5
        %vm397 = vcmask 64512
        %v398 = vsel %vm397, %v396, -inf
        %v399 = vrot.slane %v398, 4
        %v400 = vmax.f32 %v398, %v399
        %v401 = vrot.slane %v400, 2
        %v402 = vmax.f32 %v400, %v401
        %v403 = vrot.slane %v402, 1
        %v404 = vmax.f32 %v402, %v403
        %v405 = vsub.f32 %v396, %v404
        %v406 = vmul.f32 %v405, 1.442695
        %v407 = vpow.pop %v406
        %v408 = vsel %vm397, %v407, 0.0
        %v409 = vrot.slane %v408, 4
        %v410 = vadd.f32 %v408, %v409
        %v411 = vrot.slane %v410, 2
        %v412 = vadd.f32 %v410, %v411
        %v413 = vrot.slane %v412, 1
        %v414 = vadd.f32 %v412, %v413
        %v415 = vrcp.pop %v414
        %v416 = vmul.f32 %v407, %v415
        %v417 = vpack.c.bf16 %v416, %v416
        %418 = vrot.lane.b32.xlu0 %v345, 64
        %v419 = vpop.permute.xlu0 %418
        %v421 = vsel %vm397, %v417, 0
        %vm423 = vcmask 1043456
        %v425 = vsel %vm423, %v419, 0
        %427 = vmatprep.subr.bf16.mxu0 0
        %428 = vmatpush1.bf16.msra.mxu0 %v425
        %429 = vmatprep.subr.bf16.mxu0 0
        %430 = vmatpush1.bf16.msra.mxu0 0
        %431 = vmatprep.subr.bf16.mxu0 0
        %432 = vmatpush1.bf16.msra.mxu0 0
        %433 = vmatprep.subr.bf16.mxu0 0
        %434 = vmatpush1.bf16.msra.mxu0 0
        %435 = vmatprep.subr.bf16.mxu0 0
        %436 = vmatpush1.bf16.msra.mxu0 0
        %437 = vmatprep.subr.bf16.mxu0 0
        %438 = vmatpush1.bf16.msra.mxu0 0
        %439 = vmatprep.subr.bf16.mxu0 0
        %440 = vmatpush1.bf16.msra.mxu0 0
        %441 = vmatprep.subr.bf16.mxu0 0
        %442 = vmatpush1.bf16.msra.mxu0 0
        %443 = vmatprep.subr.bf16.mxu0 0
        %444 = vmatpush1.bf16.msra.mxu0 0
        %445 = vmatprep.subr.bf16.mxu0 0
        %446 = vmatpush1.bf16.msra.mxu0 0
        %447 = vmatprep.subr.bf16.mxu0 0
        %448 = vmatpush1.bf16.msra.mxu0 0
        %449 = vmatprep.subr.bf16.mxu0 0
        %450 = vmatpush1.bf16.msra.mxu0 0
        %451 = vmatprep.subr.bf16.mxu0 0
        %452 = vmatpush1.bf16.msra.mxu0 0
        %453 = vmatprep.subr.bf16.mxu0 0
        %454 = vmatpush1.bf16.msra.mxu0 0
        %455 = vmatprep.subr.bf16.mxu0 0
        %456 = vmatpush1.bf16.msra.mxu0 0
        %457 = vmatprep.subr.bf16.mxu0 0
        %458 = vmatpush1.bf16.msra.mxu0 0
        %459 = vmatprep.mubr.bf16.mxu0 0
        %460 = vmatmul.mubr.bf16.gmra.mrb[0].mxu0 %v421
        %v461 = vpop.f32.mrb[0].mxu0
        %v462 = vadd.f32 0.0, %v461
        %v463 = vpop.f32.mrb[0].mxu0
        %v464 = vpop.f32.mrb[0].mxu0
        %v465 = vpop.f32.mrb[0].mxu0
        %466 = vdwg.mxu0
        %v467 = vpack.c.bf16 %v462, %v462
        %v468 = vld [vmem:[#allocation7] sm:$0x3]
        %v470 = vsel %vm349, %v467, 0
        %vm472 = vcmask 1041408
        %v474 = vsel %vm472, %v468, 0
        %476 = vmatprep.subr.bf16.mxu0 0
        %477 = vmatpush1.bf16.msra.mxu0 %v474
        %478 = vmatprep.subr.bf16.mxu0 0
        %479 = vmatpush1.bf16.msra.mxu0 0
        %480 = vmatprep.subr.bf16.mxu0 0
        %481 = vmatpush1.bf16.msra.mxu0 0
        %482 = vmatprep.subr.bf16.mxu0 0
        %483 = vmatpush1.bf16.msra.mxu0 0
        %484 = vmatprep.subr.bf16.mxu0 0
        %485 = vmatpush1.bf16.msra.mxu0 0
        %486 = vmatprep.subr.bf16.mxu0 0
        %487 = vmatpush1.bf16.msra.mxu0 0
        %488 = vmatprep.subr.bf16.mxu0 0
        %489 = vmatpush1.bf16.msra.mxu0 0
        %490 = vmatprep.subr.bf16.mxu0 0
        %491 = vmatpush1.bf16.msra.mxu0 0
        %492 = vmatprep.subr.bf16.mxu0 0
        %493 = vmatpush1.bf16.msra.mxu0 0
        %494 = vmatprep.subr.bf16.mxu0 0
        %495 = vmatpush1.bf16.msra.mxu0 0
        %496 = vmatprep.subr.bf16.mxu0 0
        %497 = vmatpush1.bf16.msra.mxu0 0
        %498 = vmatprep.subr.bf16.mxu0 0
        %499 = vmatpush1.bf16.msra.mxu0 0
        %500 = vmatprep.subr.bf16.mxu0 0
        %501 = vmatpush1.bf16.msra.mxu0 0
        %502 = vmatprep.subr.bf16.mxu0 0
        %503 = vmatpush1.bf16.msra.mxu0 0
        %504 = vmatprep.subr.bf16.mxu0 0
        %505 = vmatpush1.bf16.msra.mxu0 0
        %506 = vmatprep.subr.bf16.mxu0 0
        %507 = vmatpush1.bf16.msra.mxu0 0
        %508 = vmatprep.mubr.bf16.mxu0 0
        %509 = vmatmul.mubr.bf16.gmra.mrb[0].mxu0 %v470
        %v510 = vpop.f32.mrb[0].mxu0
        %v511 = vadd.f32 0.0, %v510
        %v512 = vpop.f32.mrb[0].mxu0
        %v513 = vpop.f32.mrb[0].mxu0
        %v514 = vpop.f32.mrb[0].mxu0
        %515 = vdwg.mxu0
        %v516 = vadd.f32 %v343, %v511
        %517 = vrot.lane.b32.xlu0 %v345, 124
        %v518 = vpop.permute.xlu0 %517
        %519 = vrot.lane.b32.xlu0 %v345, 92
        %v520 = vpop.permute.xlu0 %519
        %v522 = vsel %vm349, %v518, 0
        %v525 = vsel %vm349, %v520, 0
        %527 = vmatprep.subr.bf16.mxu0 0
        %528 = vmatpush1.bf16.xpose.msra.mxu0 %v525
        %529 = vmatprep.subr.bf16.mxu0 0
        %530 = vmatpush1.bf16.xpose.msra.mxu0 0
        %531 = vmatprep.subr.bf16.mxu0 0
        %532 = vmatpush1.bf16.xpose.msra.mxu0 0
        %533 = vmatprep.subr.bf16.mxu0 0
        %534 = vmatpush1.bf16.xpose.msra.mxu0 0
        %535 = vmatprep.subr.bf16.mxu0 0
        %536 = vmatpush1.bf16.xpose.msra.mxu0 0
        %537 = vmatprep.subr.bf16.mxu0 0
        %538 = vmatpush1.bf16.xpose.msra.mxu0 0
        %539 = vmatprep.subr.bf16.mxu0 0
        %540 = vmatpush1.bf16.xpose.msra.mxu0 0
        %541 = vmatprep.subr.bf16.mxu0 0
        %542 = vmatpush1.bf16.xpose.msra.mxu0 0
        %543 = vmatprep.subr.bf16.mxu0 0
        %544 = vmatpush1.bf16.xpose.msra.mxu0 0
        %545 = vmatprep.subr.bf16.mxu0 0
        %546 = vmatpush1.bf16.xpose.msra.mxu0 0
        %547 = vmatprep.subr.bf16.mxu0 0
        %548 = vmatpush1.bf16.xpose.msra.mxu0 0
        %549 = vmatprep.subr.bf16.mxu0 0
        %550 = vmatpush1.bf16.xpose.msra.mxu0 0
        %551 = vmatprep.subr.bf16.mxu0 0
        %552 = vmatpush1.bf16.xpose.msra.mxu0 0
        %553 = vmatprep.subr.bf16.mxu0 0
        %554 = vmatpush1.bf16.xpose.msra.mxu0 0
        %555 = vmatprep.subr.bf16.mxu0 0
        %556 = vmatpush1.bf16.xpose.msra.mxu0 0
        %557 = vmatprep.subr.bf16.mxu0 0
        %558 = vmatpush1.bf16.xpose.msra.mxu0 0
        %559 = vmatprep.mubr.bf16.mxu0 0
        %560 = vmatmul.mubr.bf16.gmra.mrb[0].mxu0 %v522
        %v561 = vpop.f32.mrb[0].mxu0
        %v562 = vadd.f32 0.0, %v561
        %v563 = vpop.f32.mrb[0].mxu0
        %v564 = vpop.f32.mrb[0].mxu0
        %v565 = vpop.f32.mrb[0].mxu0
        %566 = vdwg.mxu0
        %v567 = vmul.f32 %v562, 0.5
        %v568 = vsel %vm397, %v567, -inf
        %v569 = vrot.slane %v568, 4
        %v570 = vmax.f32 %v568, %v569
        %v571 = vrot.slane %v570, 2
        %v572 = vmax.f32 %v570, %v571
        %v573 = vrot.slane %v572, 1
        %v574 = vmax.f32 %v572, %v573
        %v575 = vsub.f32 %v567, %v574
        %v576 = vmul.f32 %v575, 1.442695
        %v577 = vpow.pop %v576
        %v578 = vsel %vm397, %v577, 0.0
        %v579 = vrot.slane %v578, 4
        %v580 = vadd.f32 %v578, %v579
        %v581 = vrot.slane %v580, 2
        %v582 = vadd.f32 %v580, %v581
        %v583 = vrot.slane %v582, 1
        %v584 = vadd.f32 %v582, %v583
        %v585 = vrcp.pop %v584
        %v586 = vmul.f32 %v577, %v585
        %v587 = vpack.c.bf16 %v586, %v586
        %588 = vrot.lane.b32.xlu0 %v345, 60
        %v589 = vpop.permute.xlu0 %588
        %v591 = vsel %vm397, %v587, 0
        %v594 = vsel %vm423, %v589, 0
        %596 = vmatprep.subr.bf16.mxu0 0
        %597 = vmatpush1.bf16.msra.mxu0 %v594
        %598 = vmatprep.subr.bf16.mxu0 0
        %599 = vmatpush1.bf16.msra.mxu0 0
        %600 = vmatprep.subr.bf16.mxu0 0
        %601 = vmatpush1.bf16.msra.mxu0 0
        %602 = vmatprep.subr.bf16.mxu0 0
        %603 = vmatpush1.bf16.msra.mxu0 0
        %604 = vmatprep.subr.bf16.mxu0 0
        %605 = vmatpush1.bf16.msra.mxu0 0
        %606 = vmatprep.subr.bf16.mxu0 0
        %607 = vmatpush1.bf16.msra.mxu0 0
        %608 = vmatprep.subr.bf16.mxu0 0
        %609 = vmatpush1.bf16.msra.mxu0 0
        %610 = vmatprep.subr.bf16.mxu0 0
        %611 = vmatpush1.bf16.msra.mxu0 0
        %612 = vmatprep.subr.bf16.mxu0 0
        %613 = vmatpush1.bf16.msra.mxu0 0
        %614 = vmatprep.subr.bf16.mxu0 0
        %615 = vmatpush1.bf16.msra.mxu0 0
        %616 = vmatprep.subr.bf16.mxu0 0
        %617 = vmatpush1.bf16.msra.mxu0 0
        %618 = vmatprep.subr.bf16.mxu0 0
        %619 = vmatpush1.bf16.msra.mxu0 0
        %620 = vmatprep.subr.bf16.mxu0 0
        %621 = vmatpush1.bf16.msra.mxu0 0
        %622 = vmatprep.subr.bf16.mxu0 0
        %623 = vmatpush1.bf16.msra.mxu0 0
        %624 = vmatprep.subr.bf16.mxu0 0
        %625 = vmatpush1.bf16.msra.mxu0 0
        %626 = vmatprep.subr.bf16.mxu0 0
        %627 = vmatpush1.bf16.msra.mxu0 0
        %628 = vmatprep.mubr.bf16.mxu0 0
        %629 = vmatmul.mubr.bf16.gmra.mrb[0].mxu0 %v591
        %v630 = vpop.f32.mrb[0].mxu0
        %v631 = vadd.f32 0.0, %v630
        %v632 = vpop.f32.mrb[0].mxu0
        %v633 = vpop.f32.mrb[0].mxu0
        %v634 = vpop.f32.mrb[0].mxu0
        %635 = vdwg.mxu0
        %v636 = vpack.c.bf16 %v631, %v631
        %v637 = vld [vmem:[#allocation7] sm:$0xc]
        %v639 = vunpack.c.l.b16 %v637
        %v640 = vpack.c.b16 %v639, %v639
        %v641 = vrot.slane %v640, 2
        %v643 = vsel %vm349, %v636, 0
        %v646 = vsel %vm472, %v641, 0
        %648 = vmatprep.subr.bf16.mxu0 0
        %649 = vmatpush1.bf16.msra.mxu0 %v646
        %650 = vmatprep.subr.bf16.mxu0 0
        %651 = vmatpush1.bf16.msra.mxu0 0
        %652 = vmatprep.subr.bf16.mxu0 0
        %653 = vmatpush1.bf16.msra.mxu0 0
        %654 = vmatprep.subr.bf16.mxu0 0
        %655 = vmatpush1.bf16.msra.mxu0 0
        %656 = vmatprep.subr.bf16.mxu0 0
        %657 = vmatpush1.bf16.msra.mxu0 0
        %658 = vmatprep.subr.bf16.mxu0 0
        %659 = vmatpush1.bf16.msra.mxu0 0
        %660 = vmatprep.subr.bf16.mxu0 0
        %661 = vmatpush1.bf16.msra.mxu0 0
        %662 = vmatprep.subr.bf16.mxu0 0
        %663 = vmatpush1.bf16.msra.mxu0 0
        %664 = vmatprep.subr.bf16.mxu0 0
        %665 = vmatpush1.bf16.msra.mxu0 0
        %666 = vmatprep.subr.bf16.mxu0 0
        %667 = vmatpush1.bf16.msra.mxu0 0
        %668 = vmatprep.subr.bf16.mxu0 0
        %669 = vmatpush1.bf16.msra.mxu0 0
        %670 = vmatprep.subr.bf16.mxu0 0
        %671 = vmatpush1.bf16.msra.mxu0 0
        %672 = vmatprep.subr.bf16.mxu0 0
        %673 = vmatpush1.bf16.msra.mxu0 0
        %674 = vmatprep.subr.bf16.mxu0 0
        %675 = vmatpush1.bf16.msra.mxu0 0
        %676 = vmatprep.subr.bf16.mxu0 0
        %677 = vmatpush1.bf16.msra.mxu0 0
        %678 = vmatprep.subr.bf16.mxu0 0
        %679 = vmatpush1.bf16.msra.mxu0 0
        %680 = vmatprep.mubr.bf16.mxu0 0
        %681 = vmatmul.mubr.bf16.gmra.mrb[0].mxu0 %v643
        %v682 = vpop.f32.mrb[0].mxu0
        %v683 = vadd.f32 0.0, %v682
        %v684 = vpop.f32.mrb[0].mxu0
        %v685 = vpop.f32.mrb[0].mxu0
        %v686 = vpop.f32.mrb[0].mxu0
        %687 = vdwg.mxu0
        %v688 = vadd.f32 %v516, %v683
        %689 = vrot.lane.b32.xlu0 %v345, 120
        %v690 = vpop.permute.xlu0 %689
        %691 = vrot.lane.b32.xlu0 %v345, 88
        %v692 = vpop.permute.xlu0 %691
        %v694 = vsel %vm349, %v690, 0
        %v697 = vsel %vm349, %v692, 0
        %699 = vmatprep.subr.bf16.mxu0 0
        %700 = vmatpush1.bf16.xpose.msra.mxu0 %v697
        %701 = vmatprep.subr.bf16.mxu0 0
        %702 = vmatpush1.bf16.xpose.msra.mxu0 0
        %703 = vmatprep.subr.bf16.mxu0 0
        %704 = vmatpush1.bf16.xpose.msra.mxu0 0
        %705 = vmatprep.subr.bf16.mxu0 0
        %706 = vmatpush1.bf16.xpose.msra.mxu0 0
        %707 = vmatprep.subr.bf16.mxu0 0
        %708 = vmatpush1.bf16.xpose.msra.mxu0 0
        %709 = vmatprep.subr.bf16.mxu0 0
        %710 = vmatpush1.bf16.xpose.msra.mxu0 0
        %711 = vmatprep.subr.bf16.mxu0 0
        %712 = vmatpush1.bf16.xpose.msra.mxu0 0
        %713 = vmatprep.subr.bf16.mxu0 0
        %714 = vmatpush1.bf16.xpose.msra.mxu0 0
        %715 = vmatprep.subr.bf16.mxu0 0
        %716 = vmatpush1.bf16.xpose.msra.mxu0 0
        %717 = vmatprep.subr.bf16.mxu0 0
        %718 = vmatpush1.bf16.xpose.msra.mxu0 0
        %719 = vmatprep.subr.bf16.mxu0 0
        %720 = vmatpush1.bf16.xpose.msra.mxu0 0
        %721 = vmatprep.subr.bf16.mxu0 0
        %722 = vmatpush1.bf16.xpose.msra.mxu0 0
        %723 = vmatprep.subr.bf16.mxu0 0
        %724 = vmatpush1.bf16.xpose.msra.mxu0 0
        %725 = vmatprep.subr.bf16.mxu0 0
        %726 = vmatpush1.bf16.xpose.msra.mxu0 0
        %727 = vmatprep.subr.bf16.mxu0 0
        %728 = vmatpush1.bf16.xpose.msra.mxu0 0
        %729 = vmatprep.subr.bf16.mxu0 0
        %730 = vmatpush1.bf16.xpose.msra.mxu0 0
        %731 = vmatprep.mubr.bf16.mxu0 0
        %732 = vmatmul.mubr.bf16.gmra.mrb[0].mxu0 %v694
        %v733 = vpop.f32.mrb[0].mxu0
        %v734 = vadd.f32 0.0, %v733
        %v735 = vpop.f32.mrb[0].mxu0
        %v736 = vpop.f32.mrb[0].mxu0
        %v737 = vpop.f32.mrb[0].mxu0
        %738 = vdwg.mxu0
        %v739 = vmul.f32 %v734, 0.5
        %v740 = vsel %vm397, %v739, -inf
        %v741 = vrot.slane %v740, 4
        %v742 = vmax.f32 %v740, %v741
        %v743 = vrot.slane %v742, 2
        %v744 = vmax.f32 %v742, %v743
        %v745 = vrot.slane %v744, 1
        %v746 = vmax.f32 %v744, %v745
        %v747 = vsub.f32 %v739, %v746
        %v748 = vmul.f32 %v747, 1.442695
        %v749 = vpow.pop %v748
        %v750 = vsel %vm397, %v749, 0.0
        %v751 = vrot.slane %v750, 4
        %v752 = vadd.f32 %v750, %v751
        %v753 = vrot.slane %v752, 2
        %v754 = vadd.f32 %v752, %v753
        %v755 = vrot.slane %v754, 1
        %v756 = vadd.f32 %v754, %v755
        %v757 = vrcp.pop %v756
        %v758 = vmul.f32 %v749, %v757
        %v759 = vpack.c.bf16 %v758, %v758
        %760 = vrot.lane.b32.xlu0 %v345, 56
        %v761 = vpop.permute.xlu0 %760
        %v763 = vsel %vm397, %v759, 0
        %v766 = vsel %vm423, %v761, 0
        %768 = vmatprep.subr.bf16.mxu0 0
        %769 = vmatpush1.bf16.msra.mxu0 %v766
        %770 = vmatprep.subr.bf16.mxu0 0
        %771 = vmatpush1.bf16.msra.mxu0 0
        %772 = vmatprep.subr.bf16.mxu0 0
        %773 = vmatpush1.bf16.msra.mxu0 0
        %774 = vmatprep.subr.bf16.mxu0 0
        %775 = vmatpush1.bf16.msra.mxu0 0
        %776 = vmatprep.subr.bf16.mxu0 0
        %777 = vmatpush1.bf16.msra.mxu0 0
        %778 = vmatprep.subr.bf16.mxu0 0
        %779 = vmatpush1.bf16.msra.mxu0 0
        %780 = vmatprep.subr.bf16.mxu0 0
        %781 = vmatpush1.bf16.msra.mxu0 0
        %782 = vmatprep.subr.bf16.mxu0 0
        %783 = vmatpush1.bf16.msra.mxu0 0
        %784 = vmatprep.subr.bf16.mxu0 0
        %785 = vmatpush1.bf16.msra.mxu0 0
        %786 = vmatprep.subr.bf16.mxu0 0
        %787 = vmatpush1.bf16.msra.mxu0 0
        %788 = vmatprep.subr.bf16.mxu0 0
        %789 = vmatpush1.bf16.msra.mxu0 0
        %790 = vmatprep.subr.bf16.mxu0 0
        %791 = vmatpush1.bf16.msra.mxu0 0
        %792 = vmatprep.subr.bf16.mxu0 0
        %793 = vmatpush1.bf16.msra.mxu0 0
        %794 = vmatprep.subr.bf16.mxu0 0
        %795 = vmatpush1.bf16.msra.mxu0 0
        %796 = vmatprep.subr.bf16.mxu0 0
        %797 = vmatpush1.bf16.msra.mxu0 0
        %798 = vmatprep.subr.bf16.mxu0 0
        %799 = vmatpush1.bf16.msra.mxu0 0
        %800 = vmatprep.mubr.bf16.mxu0 0
        %801 = vmatmul.mubr.bf16.gmra.mrb[0].mxu0 %v763
        %v802 = vpop.f32.mrb[0].mxu0
        %v803 = vadd.f32 0.0, %v802
        %v804 = vpop.f32.mrb[0].mxu0
        %v805 = vpop.f32.mrb[0].mxu0
        %v806 = vpop.f32.mrb[0].mxu0
        %807 = vdwg.mxu0
        %v808 = vpack.c.bf16 %v803, %v803
        %v809 = vld [vmem:[#allocation7 + $0x4] sm:$0x3]
        %v811 = vsel %vm349, %v808, 0
        %v814 = vsel %vm472, %v809, 0
        %816 = vmatprep.subr.bf16.mxu0 0
        %817 = vmatpush1.bf16.msra.mxu0 %v814
        %818 = vmatprep.subr.bf16.mxu0 0
        %819 = vmatpush1.bf16.msra.mxu0 0
        %820 = vmatprep.subr.bf16.mxu0 0
        %821 = vmatpush1.bf16.msra.mxu0 0
        %822 = vmatprep.subr.bf16.mxu0 0
        %823 = vmatpush1.bf16.msra.mxu0 0
        %824 = vmatprep.subr.bf16.mxu0 0
        %825 = vmatpush1.bf16.msra.mxu0 0
        %826 = vmatprep.subr.bf16.mxu0 0
        %827 = vmatpush1.bf16.msra.mxu0 0
        %828 = vmatprep.subr.bf16.mxu0 0
        %829 = vmatpush1.bf16.msra.mxu0 0
        %830 = vmatprep.subr.bf16.mxu0 0
        %831 = vmatpush1.bf16.msra.mxu0 0
        %832 = vmatprep.subr.bf16.mxu0 0
        %833 = vmatpush1.bf16.msra.mxu0 0
        %834 = vmatprep.subr.bf16.mxu0 0
        %835 = vmatpush1.bf16.msra.mxu0 0
        %836 = vmatprep.subr.bf16.mxu0 0
        %837 = vmatpush1.bf16.msra.mxu0 0
        %838 = vmatprep.subr.bf16.mxu0 0
        %839 = vmatpush1.bf16.msra.mxu0 0
        %840 = vmatprep.subr.bf16.mxu0 0
        %841 = vmatpush1.bf16.msra.mxu0 0
        %842 = vmatprep.subr.bf16.mxu0 0
        %843 = vmatpush1.bf16.msra.mxu0 0
        %844 = vmatprep.subr.bf16.mxu0 0
        %845 = vmatpush1.bf16.msra.mxu0 0
        %846 = vmatprep.subr.bf16.mxu0 0
        %847 = vmatpush1.bf16.msra.mxu0 0
        %848 = vmatprep.mubr.bf16.mxu0 0
        %849 = vmatmul.mubr.bf16.gmra.mrb[0].mxu0 %v811
        %v850 = vpop.f32.mrb[0].mxu0
        %v851 = vadd.f32 0.0, %v850
        %v852 = vpop.f32.mrb[0].mxu0
        %v853 = vpop.f32.mrb[0].mxu0
        %v854 = vpop.f32.mrb[0].mxu0
        %855 = vdwg.mxu0
        %v856 = vadd.f32 %v688, %v851
        %857 = vrot.lane.b32.xlu0 %v345, 116
        %v858 = vpop.permute.xlu0 %857
        %859 = vrot.lane.b32.xlu0 %v345, 84
        %v860 = vpop.permute.xlu0 %859
        %v862 = vsel %vm349, %v858, 0
        %v865 = vsel %vm349, %v860, 0
        %867 = vmatprep.subr.bf16.mxu0 0
        %868 = vmatpush1.bf16.xpose.msra.mxu0 %v865
        %869 = vmatprep.subr.bf16.mxu0 0
        %870 = vmatpush1.bf16.xpose.msra.mxu0 0
        %871 = vmatprep.subr.bf16.mxu0 0
        %872 = vmatpush1.bf16.xpose.msra.mxu0 0
        %873 = vmatprep.subr.bf16.mxu0 0
        %874 = vmatpush1.bf16.xpose.msra.mxu0 0
        %875 = vmatprep.subr.bf16.mxu0 0
        %876 = vmatpush1.bf16.xpose.msra.mxu0 0
        %877 = vmatprep.subr.bf16.mxu0 0
        %878 = vmatpush1.bf16.xpose.msra.mxu0 0
        %879 = vmatprep.subr.bf16.mxu0 0
        %880 = vmatpush1.bf16.xpose.msra.mxu0 0
        %881 = vmatprep.subr.bf16.mxu0 0
        %882 = vmatpush1.bf16.xpose.msra.mxu0 0
        %883 = vmatprep.subr.bf16.mxu0 0
        %884 = vmatpush1.bf16.xpose.msra.mxu0 0
        %885 = vmatprep.subr.bf16.mxu0 0
        %886 = vmatpush1.bf16.xpose.msra.mxu0 0
        %887 = vmatprep.subr.bf16.mxu0 0
        %888 = vmatpush1.bf16.xpose.msra.mxu0 0
        %889 = vmatprep.subr.bf16.mxu0 0
        %890 = vmatpush1.bf16.xpose.msra.mxu0 0
        %891 = vmatprep.subr.bf16.mxu0 0
        %892 = vmatpush1.bf16.xpose.msra.mxu0 0
        %893 = vmatprep.subr.bf16.mxu0 0
        %894 = vmatpush1.bf16.xpose.msra.mxu0 0
        %895 = vmatprep.subr.bf16.mxu0 0
        %896 = vmatpush1.bf16.xpose.msra.mxu0 0
        %897 = vmatprep.subr.bf16.mxu0 0
        %898 = vmatpush1.bf16.xpose.msra.mxu0 0
        %899 = vmatprep.mubr.bf16.mxu0 0
        %900 = vmatmul.mubr.bf16.gmra.mrb[0].mxu0 %v862
        %v901 = vpop.f32.mrb[0].mxu0
        %v902 = vadd.f32 0.0, %v901
        %v903 = vpop.f32.mrb[0].mxu0
        %v904 = vpop.f32.mrb[0].mxu0
        %v905 = vpop.f32.mrb[0].mxu0
        %906 = vdwg.mxu0
        %v907 = vmul.f32 %v902, 0.5
        %v908 = vsel %vm397, %v907, -inf
        %v909 = vrot.slane %v908, 4
        %v910 = vmax.f32 %v908, %v909
        %v911 = vrot.slane %v910, 2
        %v912 = vmax.f32 %v910, %v911
        %v913 = vrot.slane %v912, 1
        %v914 = vmax.f32 %v912, %v913
        %v915 = vsub.f32 %v907, %v914
        %v916 = vmul.f32 %v915, 1.442695
        %v917 = vpow.pop %v916
        %v918 = vsel %vm397, %v917, 0.0
        %v919 = vrot.slane %v918, 4
        %v920 = vadd.f32 %v918, %v919
        %v921 = vrot.slane %v920, 2
        %v922 = vadd.f32 %v920, %v921
        %v923 = vrot.slane %v922, 1
        %v924 = vadd.f32 %v922, %v923
        %v925 = vrcp.pop %v924
        %v926 = vmul.f32 %v917, %v925
        %v927 = vpack.c.bf16 %v926, %v926
        %928 = vrot.lane.b32.xlu0 %v345, 52
        %v929 = vpop.permute.xlu0 %928
        %v931 = vsel %vm397, %v927, 0
        %v934 = vsel %vm423, %v929, 0
        %936 = vmatprep.subr.bf16.mxu0 0
        %937 = vmatpush1.bf16.msra.mxu0 %v934
        %938 = vmatprep.subr.bf16.mxu0 0
        %939 = vmatpush1.bf16.msra.mxu0 0
        %940 = vmatprep.subr.bf16.mxu0 0
        %941 = vmatpush1.bf16.msra.mxu0 0
        %942 = vmatprep.subr.bf16.mxu0 0
        %943 = vmatpush1.bf16.msra.mxu0 0
        %944 = vmatprep.subr.bf16.mxu0 0
        %945 = vmatpush1.bf16.msra.mxu0 0
        %946 = vmatprep.subr.bf16.mxu0 0
        %947 = vmatpush1.bf16.msra.mxu0 0
        %948 = vmatprep.subr.bf16.mxu0 0
        %949 = vmatpush1.bf16.msra.mxu0 0
        %950 = vmatprep.subr.bf16.mxu0 0
        %951 = vmatpush1.bf16.msra.mxu0 0
        %952 = vmatprep.subr.bf16.mxu0 0
        %953 = vmatpush1.bf16.msra.mxu0 0
        %954 = vmatprep.subr.bf16.mxu0 0
        %955 = vmatpush1.bf16.msra.mxu0 0
        %956 = vmatprep.subr.bf16.mxu0 0
        %957 = vmatpush1.bf16.msra.mxu0 0
        %958 = vmatprep.subr.bf16.mxu0 0
        %959 = vmatpush1.bf16.msra.mxu0 0
        %960 = vmatprep.subr.bf16.mxu0 0
        %961 = vmatpush1.bf16.msra.mxu0 0
        %962 = vmatprep.subr.bf16.mxu0 0
        %963 = vmatpush1.bf16.msra.mxu0 0
        %964 = vmatprep.subr.bf16.mxu0 0
        %965 = vmatpush1.bf16.msra.mxu0 0
        %966 = vmatprep.subr.bf16.mxu0 0
        %967 = vmatpush1.bf16.msra.mxu0 0
        %968 = vmatprep.mubr.bf16.mxu0 0
        %969 = vmatmul.mubr.bf16.gmra.mrb[0].mxu0 %v931
        %v970 = vpop.f32.mrb[0].mxu0
        %v971 = vadd.f32 0.0, %v970
        %v972 = vpop.f32.mrb[0].mxu0
        %v973 = vpop.f32.mrb[0].mxu0
        %v974 = vpop.f32.mrb[0].mxu0
        %975 = vdwg.mxu0
        %v976 = vpack.c.bf16 %v971, %v971
        %v977 = vld [vmem:[#allocation7 + $0x4] sm:$0xc]
        %v979 = vunpack.c.l.b16 %v977
        %v980 = vpack.c.b16 %v979, %v979
        %v981 = vrot.slane %v980, 2
        %v983 = vsel %vm349, %v976, 0
        %v986 = vsel %vm472, %v981, 0
        %988 = vmatprep.subr.bf16.mxu0 0
        %989 = vmatpush1.bf16.msra.mxu0 %v986
        %990 = vmatprep.subr.bf16.mxu0 0
        %991 = vmatpush1.bf16.msra.mxu0 0
        %992 = vmatprep.subr.bf16.mxu0 0
        %993 = vmatpush1.bf16.msra.mxu0 0
        %994 = vmatprep.subr.bf16.mxu0 0
        %995 = vmatpush1.bf16.msra.mxu0 0
        %996 = vmatprep.subr.bf16.mxu0 0
        %997 = vmatpush1.bf16.msra.mxu0 0
        %998 = vmatprep.subr.bf16.mxu0 0
        %999 = vmatpush1.bf16.msra.mxu0 0
        %1000 = vmatprep.subr.bf16.mxu0 0
        %1001 = vmatpush1.bf16.msra.mxu0 0
        %1002 = vmatprep.subr.bf16.mxu0 0
        %1003 = vmatpush1.bf16.msra.mxu0 0
        %1004 = vmatprep.subr.bf16.mxu0 0
        %1005 = vmatpush1.bf16.msra.mxu0 0
        %1006 = vmatprep.subr.bf16.mxu0 0
        %1007 = vmatpush1.bf16.msra.mxu0 0
        %1008 = vmatprep.subr.bf16.mxu0 0
        %1009 = vmatpush1.bf16.msra.mxu0 0
        %1010 = vmatprep.subr.bf16.mxu0 0
        %1011 = vmatpush1.bf16.msra.mxu0 0
        %1012 = vmatprep.subr.bf16.mxu0 0
        %1013 = vmatpush1.bf16.msra.mxu0 0
        %1014 = vmatprep.subr.bf16.mxu0 0
        %1015 = vmatpush1.bf16.msra.mxu0 0
        %1016 = vmatprep.subr.bf16.mxu0 0
        %1017 = vmatpush1.bf16.msra.mxu0 0
        %1018 = vmatprep.subr.bf16.mxu0 0
        %1019 = vmatpush1.bf16.msra.mxu0 0
        %1020 = vmatprep.mubr.bf16.mxu0 0
        %1021 = vmatmul.mubr.bf16.gmra.mrb[0].mxu0 %v983
        %v1022 = vpop.f32.mrb[0].mxu0
        %v1023 = vadd.f32 0.0, %v1022
        %v1024 = vpop.f32.mrb[0].mxu0
        %v1025 = vpop.f32.mrb[0].mxu0
        %v1026 = vpop.f32.mrb[0].mxu0
        %1027 = vdwg.mxu0
        %v1028 = vadd.f32 %v856, %v1023
        %1029 = vrot.lane.b32.xlu0 %v345, 112
        %v1030 = vpop.permute.xlu0 %1029
        %1031 = vrot.lane.b32.xlu0 %v345, 80
        %v1032 = vpop.permute.xlu0 %1031
        %v1034 = vsel %vm349, %v1030, 0
        %v1037 = vsel %vm349, %v1032, 0
        %1039 = vmatprep.subr.bf16.mxu0 0
        %1040 = vmatpush1.bf16.xpose.msra.mxu0 %v1037
        %1041 = vmatprep.subr.bf16.mxu0 0
        %1042 = vmatpush1.bf16.xpose.msra.mxu0 0
        %1043 = vmatprep.subr.bf16.mxu0 0
        %1044 = vmatpush1.bf16.xpose.msra.mxu0 0
        %1045 = vmatprep.subr.bf16.mxu0 0
        %1046 = vmatpush1.bf16.xpose.msra.mxu0 0
        %1047 = vmatprep.subr.bf16.mxu0 0
        %1048 = vmatpush1.bf16.xpose.msra.mxu0 0
        %1049 = vmatprep.subr.bf16.mxu0 0
        %1050 = vmatpush1.bf16.xpose.msra.mxu0 0
        %1051 = vmatprep.subr.bf16.mxu0 0
        %1052 = vmatpush1.bf16.xpose.msra.mxu0 0
        %1053 = vmatprep.subr.bf16.mxu0 0
        %1054 = vmatpush1.bf16.xpose.msra.mxu0 0
        %1055 = vmatprep.subr.bf16.mxu0 0
        %1056 = vmatpush1.bf16.xpose.msra.mxu0 0
        %1057 = vmatprep.subr.bf16.mxu0 0
        %1058 = vmatpush1.bf16.xpose.msra.mxu0 0
        %1059 = vmatprep.subr.bf16.mxu0 0
        %1060 = vmatpush1.bf16.xpose.msra.mxu0 0
        %1061 = vmatprep.subr.bf16.mxu0 0
        %1062 = vmatpush1.bf16.xpose.msra.mxu0 0
        %1063 = vmatprep.subr.bf16.mxu0 0
        %1064 = vmatpush1.bf16.xpose.msra.mxu0 0
        %1065 = vmatprep.subr.bf16.mxu0 0
        %1066 = vmatpush1.bf16.xpose.msra.mxu0 0
        %1067 = vmatprep.subr.bf16.mxu0 0
        %1068 = vmatpush1.bf16.xpose.msra.mxu0 0
        %1069 = vmatprep.subr.bf16.mxu0 0
        %1070 = vmatpush1.bf16.xpose.msra.mxu0 0
        %1071 = vmatprep.mubr.bf16.mxu0 0
        %1072 = vmatmul.mubr.bf16.gmra.mrb[0].mxu0 %v1034
        %v1073 = vpop.f32.mrb[0].mxu0
        %v1074 = vadd.f32 0.0, %v1073
        %v1075 = vpop.f32.mrb[0].mxu0
        %v1076 = vpop.f32.mrb[0].mxu0
        %v1077 = vpop.f32.mrb[0].mxu0
        %1078 = vdwg.mxu0
        %v1079 = vmul.f32 %v1074, 0.5
        %v1080 = vsel %vm397, %v1079, -inf
        %v1081 = vrot.slane %v1080, 4
        %v1082 = vmax.f32 %v1080, %v1081
        %v1083 = vrot.slane %v1082, 2
        %v1084 = vmax.f32 %v1082, %v1083
        %v1085 = vrot.slane %v1084, 1
        %v1086 = vmax.f32 %v1084, %v1085
        %v1087 = vsub.f32 %v1079, %v1086
        %v1088 = vmul.f32 %v1087, 1.442695
        %v1089 = vpow.pop %v1088
        %v1090 = vsel %vm397, %v1089, 0.0
        %v1091 = vrot.slane %v1090, 4
        %v1092 = vadd.f32 %v1090, %v1091
        %v1093 = vrot.slane %v1092, 2
        %v1094 = vadd.f32 %v1092, %v1093
        %v1095 = vrot.slane %v1094, 1
        %v1096 = vadd.f32 %v1094, %v1095
        %v1097 = vrcp.pop %v1096
        %v1098 = vmul.f32 %v1089, %v1097
        %v1099 = vpack.c.bf16 %v1098, %v1098
        %1100 = vrot.lane.b32.xlu0 %v345, 48
        %v1101 = vpop.permute.xlu0 %1100
        %v1103 = vsel %vm397, %v1099, 0
        %v1106 = vsel %vm423, %v1101, 0
        %1108 = vmatprep.subr.bf16.mxu0 0
        %1109 = vmatpush1.bf16.msra.mxu0 %v1106
        %1110 = vmatprep.subr.bf16.mxu0 0
        %1111 = vmatpush1.bf16.msra.mxu0 0
        %1112 = vmatprep.subr.bf16.mxu0 0
        %1113 = vmatpush1.bf16.msra.mxu0 0
        %1114 = vmatprep.subr.bf16.mxu0 0
        %1115 = vmatpush1.bf16.msra.mxu0 0
        %1116 = vmatprep.subr.bf16.mxu0 0
        %1117 = vmatpush1.bf16.msra.mxu0 0
        %1118 = vmatprep.subr.bf16.mxu0 0
        %1119 = vmatpush1.bf16.msra.mxu0 0
        %1120 = vmatprep.subr.bf16.mxu0 0
        %1121 = vmatpush1.bf16.msra.mxu0 0
        %1122 = vmatprep.subr.bf16.mxu0 0
        %1123 = vmatpush1.bf16.msra.mxu0 0
        %1124 = vmatprep.subr.bf16.mxu0 0
        %1125 = vmatpush1.bf16.msra.mxu0 0
        %1126 = vmatprep.subr.bf16.mxu0 0
        %1127 = vmatpush1.bf16.msra.mxu0 0
        %1128 = vmatprep.subr.bf16.mxu0 0
        %1129 = vmatpush1.bf16.msra.mxu0 0
        %1130 = vmatprep.subr.bf16.mxu0 0
        %1131 = vmatpush1.bf16.msra.mxu0 0
        %1132 = vmatprep.subr.bf16.mxu0 0
        %1133 = vmatpush1.bf16.msra.mxu0 0
        %1134 = vmatprep.subr.bf16.mxu0 0
        %1135 = vmatpush1.bf16.msra.mxu0 0
        %1136 = vmatprep.subr.bf16.mxu0 0
        %1137 = vmatpush1.bf16.msra.mxu0 0
        %1138 = vmatprep.subr.bf16.mxu0 0
        %1139 = vmatpush1.bf16.msra.mxu0 0
        %1140 = vmatprep.mubr.bf16.mxu0 0
        %1141 = vmatmul.mubr.bf16.gmra.mrb[0].mxu0 %v1103
        %v1142 = vpop.f32.mrb[0].mxu0
        %v1143 = vadd.f32 0.0, %v1142
        %v1144 = vpop.f32.mrb[0].mxu0
        %v1145 = vpop.f32.mrb[0].mxu0
        %v1146 = vpop.f32.mrb[0].mxu0
        %1147 = vdwg.mxu0
        %v1148 = vpack.c.bf16 %v1143, %v1143
        %v1149 = vld [vmem:[#allocation7 + $0x8] sm:$0x3]
        %v1151 = vsel %vm349, %v1148, 0
        %v1154 = vsel %vm472, %v1149, 0
        %1156 = vmatprep.subr.bf16.mxu0 0
        %1157 = vmatpush1.bf16.msra.mxu0 %v1154
        %1158 = vmatprep.subr.bf16.mxu0 0
        %1159 = vmatpush1.bf16.msra.mxu0 0
        %1160 = vmatprep.subr.bf16.mxu0 0
        %1161 = vmatpush1.bf16.msra.mxu0 0
        %1162 = vmatprep.subr.bf16.mxu0 0
        %1163 = vmatpush1.bf16.msra.mxu0 0
        %1164 = vmatprep.subr.bf16.mxu0 0
        %1165 = vmatpush1.bf16.msra.mxu0 0
        %1166 = vmatprep.subr.bf16.mxu0 0
        %1167 = vmatpush1.bf16.msra.mxu0 0
        %1168 = vmatprep.subr.bf16.mxu0 0
        %1169 = vmatpush1.bf16.msra.mxu0 0
        %1170 = vmatprep.subr.bf16.mxu0 0
        %1171 = vmatpush1.bf16.msra.mxu0 0
        %1172 = vmatprep.subr.bf16.mxu0 0
        %1173 = vmatpush1.bf16.msra.mxu0 0
        %1174 = vmatprep.subr.bf16.mxu0 0
        %1175 = vmatpush1.bf16.msra.mxu0 0
        %1176 = vmatprep.subr.bf16.mxu0 0
        %1177 = vmatpush1.bf16.msra.mxu0 0
        %1178 = vmatprep.subr.bf16.mxu0 0
        %1179 = vmatpush1.bf16.msra.mxu0 0
        %1180 = vmatprep.subr.bf16.mxu0 0
        %1181 = vmatpush1.bf16.msra.mxu0 0
        %1182 = vmatprep.subr.bf16.mxu0 0
        %1183 = vmatpush1.bf16.msra.mxu0 0
        %1184 = vmatprep.subr.bf16.mxu0 0
        %1185 = vmatpush1.bf16.msra.mxu0 0
        %1186 = vmatprep.subr.bf16.mxu0 0
        %1187 = vmatpush1.bf16.msra.mxu0 0
        %1188 = vmatprep.mubr.bf16.mxu0 0
        %1189 = vmatmul.mubr.bf16.gmra.mrb[0].mxu0 %v1151
        %v1190 = vpop.f32.mrb[0].mxu0
        %v1191 = vadd.f32 0.0, %v1190
        %v1192 = vpop.f32.mrb[0].mxu0
        %v1193 = vpop.f32.mrb[0].mxu0
        %v1194 = vpop.f32.mrb[0].mxu0
        %1195 = vdwg.mxu0
        %v1196 = vadd.f32 %v1028, %v1191
        %1197 = vrot.lane.b32.xlu0 %v345, 108
        %v1198 = vpop.permute.xlu0 %1197
        %1199 = vrot.lane.b32.xlu0 %v345, 76
        %v1200 = vpop.permute.xlu0 %1199
        %v1202 = vsel %vm349, %v1198, 0
        %v1205 = vsel %vm349, %v1200, 0
        %1207 = vmatprep.subr.bf16.mxu0 0
        %1208 = vmatpush1.bf16.xpose.msra.mxu0 %v1205
        %1209 = vmatprep.subr.bf16.mxu0 0
        %1210 = vmatpush1.bf16.xpose.msra.mxu0 0
        %1211 = vmatprep.subr.bf16.mxu0 0
        %1212 = vmatpush1.bf16.xpose.msra.mxu0 0
        %1213 = vmatprep.subr.bf16.mxu0 0
        %1214 = vmatpush1.bf16.xpose.msra.mxu0 0
        %1215 = vmatprep.subr.bf16.mxu0 0
        %1216 = vmatpush1.bf16.xpose.msra.mxu0 0
        %1217 = vmatprep.subr.bf16.mxu0 0
        %1218 = vmatpush1.bf16.xpose.msra.mxu0 0
        %1219 = vmatprep.subr.bf16.mxu0 0
        %1220 = vmatpush1.bf16.xpose.msra.mxu0 0
        %1221 = vmatprep.subr.bf16.mxu0 0
        %1222 = vmatpush1.bf16.xpose.msra.mxu0 0
        %1223 = vmatprep.subr.bf16.mxu0 0
        %1224 = vmatpush1.bf16.xpose.msra.mxu0 0
        %1225 = vmatprep.subr.bf16.mxu0 0
        %1226 = vmatpush1.bf16.xpose.msra.mxu0 0
        %1227 = vmatprep.subr.bf16.mxu0 0
        %1228 = vmatpush1.bf16.xpose.msra.mxu0 0
        %1229 = vmatprep.subr.bf16.mxu0 0
        %1230 = vmatpush1.bf16.xpose.msra.mxu0 0
        %1231 = vmatprep.subr.bf16.mxu0 0
        %1232 = vmatpush1.bf16.xpose.msra.mxu0 0
        %1233 = vmatprep.subr.bf16.mxu0 0
        %1234 = vmatpush1.bf16.xpose.msra.mxu0 0
        %1235 = vmatprep.subr.bf16.mxu0 0
        %1236 = vmatpush1.bf16.xpose.msra.mxu0 0
        %1237 = vmatprep.subr.bf16.mxu0 0
        %1238 = vmatpush1.bf16.xpose.msra.mxu0 0
        %1239 = vmatprep.mubr.bf16.mxu0 0
        %1240 = vmatmul.mubr.bf16.gmra.mrb[0].mxu0 %v1202
        %v1241 = vpop.f32.mrb[0].mxu0
        %v1242 = vadd.f32 0.0, %v1241
        %v1243 = vpop.f32.mrb[0].mxu0
        %v1244 = vpop.f32.mrb[0].mxu0
        %v1245 = vpop.f32.mrb[0].mxu0
        %1246 = vdwg.mxu0
        %v1247 = vmul.f32 %v1242, 0.5
        %v1248 = vsel %vm397, %v1247, -inf
        %v1249 = vrot.slane %v1248, 4
        %v1250 = vmax.f32 %v1248, %v1249
        %v1251 = vrot.slane %v1250, 2
        %v1252 = vmax.f32 %v1250, %v1251
        %v1253 = vrot.slane %v1252, 1
        %v1254 = vmax.f32 %v1252, %v1253
        %v1255 = vsub.f32 %v1247, %v1254
        %v1256 = vmul.f32 %v1255, 1.442695
        %v1257 = vpow.pop %v1256
        %v1258 = vsel %vm397, %v1257, 0.0
        %v1259 = vrot.slane %v1258, 4
        %v1260 = vadd.f32 %v1258, %v1259
        %v1261 = vrot.slane %v1260, 2
        %v1262 = vadd.f32 %v1260, %v1261
        %v1263 = vrot.slane %v1262, 1
        %v1264 = vadd.f32 %v1262, %v1263
        %v1265 = vrcp.pop %v1264
        %v1266 = vmul.f32 %v1257, %v1265
        %v1267 = vpack.c.bf16 %v1266, %v1266
        %1268 = vrot.lane.b32.xlu0 %v345, 44
        %v1269 = vpop.permute.xlu0 %1268
        %v1271 = vsel %vm397, %v1267, 0
        %v1274 = vsel %vm423, %v1269, 0
        %1276 = vmatprep.subr.bf16.mxu0 0
        %1277 = vmatpush1.bf16.msra.mxu0 %v1274
        %1278 = vmatprep.subr.bf16.mxu0 0
        %1279 = vmatpush1.bf16.msra.mxu0 0
        %1280 = vmatprep.subr.bf16.mxu0 0
        %1281 = vmatpush1.bf16.msra.mxu0 0
        %1282 = vmatprep.subr.bf16.mxu0 0
        %1283 = vmatpush1.bf16.msra.mxu0 0
        %1284 = vmatprep.subr.bf16.mxu0 0
        %1285 = vmatpush1.bf16.msra.mxu0 0
        %1286 = vmatprep.subr.bf16.mxu0 0
        %1287 = vmatpush1.bf16.msra.mxu0 0
        %1288 = vmatprep.subr.bf16.mxu0 0
        %1289 = vmatpush1.bf16.msra.mxu0 0
        %1290 = vmatprep.subr.bf16.mxu0 0
        %1291 = vmatpush1.bf16.msra.mxu0 0
        %1292 = vmatprep.subr.bf16.mxu0 0
        %1293 = vmatpush1.bf16.msra.mxu0 0
        %1294 = vmatprep.subr.bf16.mxu0 0
        %1295 = vmatpush1.bf16.msra.mxu0 0
        %1296 = vmatprep.subr.bf16.mxu0 0
        %1297 = vmatpush1.bf16.msra.mxu0 0
        %1298 = vmatprep.subr.bf16.mxu0 0
        %1299 = vmatpush1.bf16.msra.mxu0 0
        %1300 = vmatprep.subr.bf16.mxu0 0
        %1301 = vmatpush1.bf16.msra.mxu0 0
        %1302 = vmatprep.subr.bf16.mxu0 0
        %1303 = vmatpush1.bf16.msra.mxu0 0
        %1304 = vmatprep.subr.bf16.mxu0 0
        %1305 = vmatpush1.bf16.msra.mxu0 0
        %1306 = vmatprep.subr.bf16.mxu0 0
        %1307 = vmatpush1.bf16.msra.mxu0 0
        %1308 = vmatprep.mubr.bf16.mxu0 0
        %1309 = vmatmul.mubr.bf16.gmra.mrb[0].mxu0 %v1271
        %v1310 = vpop.f32.mrb[0].mxu0
        %v1311 = vadd.f32 0.0, %v1310
        %v1312 = vpop.f32.mrb[0].mxu0
        %v1313 = vpop.f32.mrb[0].mxu0
        %v1314 = vpop.f32.mrb[0].mxu0
        %1315 = vdwg.mxu0
        %v1316 = vpack.c.bf16 %v1311, %v1311
        %v1317 = vld [vmem:[#allocation7 + $0x8] sm:$0xc]
        %v1319 = vunpack.c.l.b16 %v1317
        %v1320 = vpack.c.b16 %v1319, %v1319
        %v1321 = vrot.slane %v1320, 2
        %v1323 = vsel %vm349, %v1316, 0
        %v1326 = vsel %vm472, %v1321, 0
        %1328 = vmatprep.subr.bf16.mxu0 0
        %1329 = vmatpush1.bf16.msra.mxu0 %v1326
        %1330 = vmatprep.subr.bf16.mxu0 0
        %1331 = vmatpush1.bf16.msra.mxu0 0
        %1332 = vmatprep.subr.bf16.mxu0 0
        %1333 = vmatpush1.bf16.msra.mxu0 0
        %1334 = vmatprep.subr.bf16.mxu0 0
        %1335 = vmatpush1.bf16.msra.mxu0 0
        %1336 = vmatprep.subr.bf16.mxu0 0
        %1337 = vmatpush1.bf16.msra.mxu0 0
        %1338 = vmatprep.subr.bf16.mxu0 0
        %1339 = vmatpush1.bf16.msra.mxu0 0
        %1340 = vmatprep.subr.bf16.mxu0 0
        %1341 = vmatpush1.bf16.msra.mxu0 0
        %1342 = vmatprep.subr.bf16.mxu0 0
        %1343 = vmatpush1.bf16.msra.mxu0 0
        %1344 = vmatprep.subr.bf16.mxu0 0
        %1345 = vmatpush1.bf16.msra.mxu0 0
        %1346 = vmatprep.subr.bf16.mxu0 0
        %1347 = vmatpush1.bf16.msra.mxu0 0
        %1348 = vmatprep.subr.bf16.mxu0 0
        %1349 = vmatpush1.bf16.msra.mxu0 0
        %1350 = vmatprep.subr.bf16.mxu0 0
        %1351 = vmatpush1.bf16.msra.mxu0 0
        %1352 = vmatprep.subr.bf16.mxu0 0
        %1353 = vmatpush1.bf16.msra.mxu0 0
        %1354 = vmatprep.subr.bf16.mxu0 0
        %1355 = vmatpush1.bf16.msra.mxu0 0
        %1356 = vmatprep.subr.bf16.mxu0 0
        %1357 = vmatpush1.bf16.msra.mxu0 0
        %1358 = vmatprep.subr.bf16.mxu0 0
        %1359 = vmatpush1.bf16.msra.mxu0 0
        %1360 = vmatprep.mubr.bf16.mxu0 0
        %1361 = vmatmul.mubr.bf16.gmra.mrb[0].mxu0 %v1323
        %v1362 = vpop.f32.mrb[0].mxu0
        %v1363 = vadd.f32 0.0, %v1362
        %v1364 = vpop.f32.mrb[0].mxu0
        %v1365 = vpop.f32.mrb[0].mxu0
        %v1366 = vpop.f32.mrb[0].mxu0
        %1367 = vdwg.mxu0
        %v1368 = vadd.f32 %v1196, %v1363
        %1369 = vrot.lane.b32.xlu0 %v345, 104
        %v1370 = vpop.permute.xlu0 %1369
        %1371 = vrot.lane.b32.xlu0 %v345, 72
        %v1372 = vpop.permute.xlu0 %1371
        %v1374 = vsel %vm349, %v1370, 0
        %v1377 = vsel %vm349, %v1372, 0
        %1379 = vmatprep.subr.bf16.mxu0 0
        %1380 = vmatpush1.bf16.xpose.msra.mxu0 %v1377
        %1381 = vmatprep.subr.bf16.mxu0 0
        %1382 = vmatpush1.bf16.xpose.msra.mxu0 0
        %1383 = vmatprep.subr.bf16.mxu0 0
        %1384 = vmatpush1.bf16.xpose.msra.mxu0 0
        %1385 = vmatprep.subr.bf16.mxu0 0
        %1386 = vmatpush1.bf16.xpose.msra.mxu0 0
        %1387 = vmatprep.subr.bf16.mxu0 0
        %1388 = vmatpush1.bf16.xpose.msra.mxu0 0
        %1389 = vmatprep.subr.bf16.mxu0 0
        %1390 = vmatpush1.bf16.xpose.msra.mxu0 0
        %1391 = vmatprep.subr.bf16.mxu0 0
        %1392 = vmatpush1.bf16.xpose.msra.mxu0 0
        %1393 = vmatprep.subr.bf16.mxu0 0
        %1394 = vmatpush1.bf16.xpose.msra.mxu0 0
        %1395 = vmatprep.subr.bf16.mxu0 0
        %1396 = vmatpush1.bf16.xpose.msra.mxu0 0
        %1397 = vmatprep.subr.bf16.mxu0 0
        %1398 = vmatpush1.bf16.xpose.msra.mxu0 0
        %1399 = vmatprep.subr.bf16.mxu0 0
        %1400 = vmatpush1.bf16.xpose.msra.mxu0 0
        %1401 = vmatprep.subr.bf16.mxu0 0
        %1402 = vmatpush1.bf16.xpose.msra.mxu0 0
        %1403 = vmatprep.subr.bf16.mxu0 0
        %1404 = vmatpush1.bf16.xpose.msra.mxu0 0
        %1405 = vmatprep.subr.bf16.mxu0 0
        %1406 = vmatpush1.bf16.xpose.msra.mxu0 0
        %1407 = vmatprep.subr.bf16.mxu0 0
        %1408 = vmatpush1.bf16.xpose.msra.mxu0 0
        %1409 = vmatprep.subr.bf16.mxu0 0
        %1410 = vmatpush1.bf16.xpose.msra.mxu0 0
        %1411 = vmatprep.mubr.bf16.mxu0 0
        %1412 = vmatmul.mubr.bf16.gmra.mrb[0].mxu0 %v1374
        %v1413 = vpop.f32.mrb[0].mxu0
        %v1414 = vadd.f32 0.0, %v1413
        %v1415 = vpop.f32.mrb[0].mxu0
        %v1416 = vpop.f32.mrb[0].mxu0
        %v1417 = vpop.f32.mrb[0].mxu0
        %1418 = vdwg.mxu0
        %v1419 = vmul.f32 %v1414, 0.5
        %v1420 = vsel %vm397, %v1419, -inf
        %v1421 = vrot.slane %v1420, 4
        %v1422 = vmax.f32 %v1420, %v1421
        %v1423 = vrot.slane %v1422, 2
        %v1424 = vmax.f32 %v1422, %v1423
        %v1425 = vrot.slane %v1424, 1
        %v1426 = vmax.f32 %v1424, %v1425
        %v1427 = vsub.f32 %v1419, %v1426
        %v1428 = vmul.f32 %v1427, 1.442695
        %v1429 = vpow.pop %v1428
        %v1430 = vsel %vm397, %v1429, 0.0
        %v1431 = vrot.slane %v1430, 4
        %v1432 = vadd.f32 %v1430, %v1431
        %v1433 = vrot.slane %v1432, 2
        %v1434 = vadd.f32 %v1432, %v1433
        %v1435 = vrot.slane %v1434, 1
        %v1436 = vadd.f32 %v1434, %v1435
        %v1437 = vrcp.pop %v1436
        %v1438 = vmul.f32 %v1429, %v1437
        %v1439 = vpack.c.bf16 %v1438, %v1438
        %1440 = vrot.lane.b32.xlu0 %v345, 40
        %v1441 = vpop.permute.xlu0 %1440
        %v1443 = vsel %vm397, %v1439, 0
        %v1446 = vsel %vm423, %v1441, 0
        %1448 = vmatprep.subr.bf16.mxu0 0
        %1449 = vmatpush1.bf16.msra.mxu0 %v1446
        %1450 = vmatprep.subr.bf16.mxu0 0
        %1451 = vmatpush1.bf16.msra.mxu0 0
        %1452 = vmatprep.subr.bf16.mxu0 0
        %1453 = vmatpush1.bf16.msra.mxu0 0
        %1454 = vmatprep.subr.bf16.mxu0 0
        %1455 = vmatpush1.bf16.msra.mxu0 0
        %1456 = vmatprep.subr.bf16.mxu0 0
        %1457 = vmatpush1.bf16.msra.mxu0 0
        %1458 = vmatprep.subr.bf16.mxu0 0
        %1459 = vmatpush1.bf16.msra.mxu0 0
        %1460 = vmatprep.subr.bf16.mxu0 0
        %1461 = vmatpush1.bf16.msra.mxu0 0
        %1462 = vmatprep.subr.bf16.mxu0 0
        %1463 = vmatpush1.bf16.msra.mxu0 0
        %1464 = vmatprep.subr.bf16.mxu0 0
        %1465 = vmatpush1.bf16.msra.mxu0 0
        %1466 = vmatprep.subr.bf16.mxu0 0
        %1467 = vmatpush1.bf16.msra.mxu0 0
        %1468 = vmatprep.subr.bf16.mxu0 0
        %1469 = vmatpush1.bf16.msra.mxu0 0
        %1470 = vmatprep.subr.bf16.mxu0 0
        %1471 = vmatpush1.bf16.msra.mxu0 0
        %1472 = vmatprep.subr.bf16.mxu0 0
        %1473 = vmatpush1.bf16.msra.mxu0 0
        %1474 = vmatprep.subr.bf16.mxu0 0
        %1475 = vmatpush1.bf16.msra.mxu0 0
        %1476 = vmatprep.subr.bf16.mxu0 0
        %1477 = vmatpush1.bf16.msra.mxu0 0
        %1478 = vmatprep.subr.bf16.mxu0 0
        %1479 = vmatpush1.bf16.msra.mxu0 0
        %1480 = vmatprep.mubr.bf16.mxu0 0
        %1481 = vmatmul.mubr.bf16.gmra.mrb[0].mxu0 %v1443
        %v1482 = vpop.f32.mrb[0].mxu0
        %v1483 = vadd.f32 0.0, %v1482
        %v1484 = vpop.f32.mrb[0].mxu0
        %v1485 = vpop.f32.mrb[0].mxu0
        %v1486 = vpop.f32.mrb[0].mxu0
        %1487 = vdwg.mxu0
        %v1488 = vpack.c.bf16 %v1483, %v1483
        %v1489 = vld [vmem:[#allocation7 + $0xc] sm:$0x3]
        %v1491 = vsel %vm349, %v1488, 0
        %v1494 = vsel %vm472, %v1489, 0
        %1496 = vmatprep.subr.bf16.mxu0 0
        %1497 = vmatpush1.bf16.msra.mxu0 %v1494
        %1498 = vmatprep.subr.bf16.mxu0 0
        %1499 = vmatpush1.bf16.msra.mxu0 0
        %1500 = vmatprep.subr.bf16.mxu0 0
        %1501 = vmatpush1.bf16.msra.mxu0 0
        %1502 = vmatprep.subr.bf16.mxu0 0
        %1503 = vmatpush1.bf16.msra.mxu0 0
        %1504 = vmatprep.subr.bf16.mxu0 0
        %1505 = vmatpush1.bf16.msra.mxu0 0
        %1506 = vmatprep.subr.bf16.mxu0 0
        %1507 = vmatpush1.bf16.msra.mxu0 0
        %1508 = vmatprep.subr.bf16.mxu0 0
        %1509 = vmatpush1.bf16.msra.mxu0 0
        %1510 = vmatprep.subr.bf16.mxu0 0
        %1511 = vmatpush1.bf16.msra.mxu0 0
        %1512 = vmatprep.subr.bf16.mxu0 0
        %1513 = vmatpush1.bf16.msra.mxu0 0
        %1514 = vmatprep.subr.bf16.mxu0 0
        %1515 = vmatpush1.bf16.msra.mxu0 0
        %1516 = vmatprep.subr.bf16.mxu0 0
        %1517 = vmatpush1.bf16.msra.mxu0 0
        %1518 = vmatprep.subr.bf16.mxu0 0
        %1519 = vmatpush1.bf16.msra.mxu0 0
        %1520 = vmatprep.subr.bf16.mxu0 0
        %1521 = vmatpush1.bf16.msra.mxu0 0
        %1522 = vmatprep.subr.bf16.mxu0 0
        %1523 = vmatpush1.bf16.msra.mxu0 0
        %1524 = vmatprep.subr.bf16.mxu0 0
        %1525 = vmatpush1.bf16.msra.mxu0 0
        %1526 = vmatprep.subr.bf16.mxu0 0
        %1527 = vmatpush1.bf16.msra.mxu0 0
        %1528 = vmatprep.mubr.bf16.mxu0 0
        %1529 = vmatmul.mubr.bf16.gmra.mrb[0].mxu0 %v1491
        %v1530 = vpop.f32.mrb[0].mxu0
        %v1531 = vadd.f32 0.0, %v1530
        %v1532 = vpop.f32.mrb[0].mxu0
        %v1533 = vpop.f32.mrb[0].mxu0
        %v1534 = vpop.f32.mrb[0].mxu0
        %1535 = vdwg.mxu0
        %v1536 = vadd.f32 %v1368, %v1531
        %1537 = vrot.lane.b32.xlu0 %v345, 100
        %v1538 = vpop.permute.xlu0 %1537
        %1539 = vrot.lane.b32.xlu0 %v345, 68
        %v1540 = vpop.permute.xlu0 %1539
        %v1542 = vsel %vm349, %v1538, 0
        %v1545 = vsel %vm349, %v1540, 0
        %1547 = vmatprep.subr.bf16.mxu0 0
        %1548 = vmatpush1.bf16.xpose.msra.mxu0 %v1545
        %1549 = vmatprep.subr.bf16.mxu0 0
        %1550 = vmatpush1.bf16.xpose.msra.mxu0 0
        %1551 = vmatprep.subr.bf16.mxu0 0
        %1552 = vmatpush1.bf16.xpose.msra.mxu0 0
        %1553 = vmatprep.subr.bf16.mxu0 0
        %1554 = vmatpush1.bf16.xpose.msra.mxu0 0
        %1555 = vmatprep.subr.bf16.mxu0 0
        %1556 = vmatpush1.bf16.xpose.msra.mxu0 0
        %1557 = vmatprep.subr.bf16.mxu0 0
        %1558 = vmatpush1.bf16.xpose.msra.mxu0 0
        %1559 = vmatprep.subr.bf16.mxu0 0
        %1560 = vmatpush1.bf16.xpose.msra.mxu0 0
        %1561 = vmatprep.subr.bf16.mxu0 0
        %1562 = vmatpush1.bf16.xpose.msra.mxu0 0
        %1563 = vmatprep.subr.bf16.mxu0 0
        %1564 = vmatpush1.bf16.xpose.msra.mxu0 0
        %1565 = vmatprep.subr.bf16.mxu0 0
        %1566 = vmatpush1.bf16.xpose.msra.mxu0 0
        %1567 = vmatprep.subr.bf16.mxu0 0
        %1568 = vmatpush1.bf16.xpose.msra.mxu0 0
        %1569 = vmatprep.subr.bf16.mxu0 0
        %1570 = vmatpush1.bf16.xpose.msra.mxu0 0
        %1571 = vmatprep.subr.bf16.mxu0 0
        %1572 = vmatpush1.bf16.xpose.msra.mxu0 0
        %1573 = vmatprep.subr.bf16.mxu0 0
        %1574 = vmatpush1.bf16.xpose.msra.mxu0 0
        %1575 = vmatprep.subr.bf16.mxu0 0
        %1576 = vmatpush1.bf16.xpose.msra.mxu0 0
        %1577 = vmatprep.subr.bf16.mxu0 0
        %1578 = vmatpush1.bf16.xpose.msra.mxu0 0
        %1579 = vmatprep.mubr.bf16.mxu0 0
        %1580 = vmatmul.mubr.bf16.gmra.mrb[0].mxu0 %v1542
        %v1581 = vpop.f32.mrb[0].mxu0
        %v1582 = vadd.f32 0.0, %v1581
        %v1583 = vpop.f32.mrb[0].mxu0
        %v1584 = vpop.f32.mrb[0].mxu0
        %v1585 = vpop.f32.mrb[0].mxu0
        %1586 = vdwg.mxu0
        %v1587 = vmul.f32 %v1582, 0.5
        %v1588 = vsel %vm397, %v1587, -inf
        %v1589 = vrot.slane %v1588, 4
        %v1590 = vmax.f32 %v1588, %v1589
        %v1591 = vrot.slane %v1590, 2
        %v1592 = vmax.f32 %v1590, %v1591
        %v1593 = vrot.slane %v1592, 1
        %v1594 = vmax.f32 %v1592, %v1593
        %v1595 = vsub.f32 %v1587, %v1594
        %v1596 = vmul.f32 %v1595, 1.442695
        %v1597 = vpow.pop %v1596
        %v1598 = vsel %vm397, %v1597, 0.0
        %v1599 = vrot.slane %v1598, 4
        %v1600 = vadd.f32 %v1598, %v1599
        %v1601 = vrot.slane %v1600, 2
        %v1602 = vadd.f32 %v1600, %v1601
        %v1603 = vrot.slane %v1602, 1
        %v1604 = vadd.f32 %v1602, %v1603
        %v1605 = vrcp.pop %v1604
        %v1606 = vmul.f32 %v1597, %v1605
        %v1607 = vpack.c.bf16 %v1606, %v1606
        %1608 = vrot.lane.b32.xlu0 %v345, 36
        %v1609 = vpop.permute.xlu0 %1608
        %v1611 = vsel %vm397, %v1607, 0
        %v1614 = vsel %vm423, %v1609, 0
        %1616 = vmatprep.subr.bf16.mxu0 0
        %1617 = vmatpush1.bf16.msra.mxu0 %v1614
        %1618 = vmatprep.subr.bf16.mxu0 0
        %1619 = vmatpush1.bf16.msra.mxu0 0
        %1620 = vmatprep.subr.bf16.mxu0 0
        %1621 = vmatpush1.bf16.msra.mxu0 0
        %1622 = vmatprep.subr.bf16.mxu0 0
        %1623 = vmatpush1.bf16.msra.mxu0 0
        %1624 = vmatprep.subr.bf16.mxu0 0
        %1625 = vmatpush1.bf16.msra.mxu0 0
        %1626 = vmatprep.subr.bf16.mxu0 0
        %1627 = vmatpush1.bf16.msra.mxu0 0
        %1628 = vmatprep.subr.bf16.mxu0 0
        %1629 = vmatpush1.bf16.msra.mxu0 0
        %1630 = vmatprep.subr.bf16.mxu0 0
        %1631 = vmatpush1.bf16.msra.mxu0 0
        %1632 = vmatprep.subr.bf16.mxu0 0
        %1633 = vmatpush1.bf16.msra.mxu0 0
        %1634 = vmatprep.subr.bf16.mxu0 0
        %1635 = vmatpush1.bf16.msra.mxu0 0
        %1636 = vmatprep.subr.bf16.mxu0 0
        %1637 = vmatpush1.bf16.msra.mxu0 0
        %1638 = vmatprep.subr.bf16.mxu0 0
        %1639 = vmatpush1.bf16.msra.mxu0 0
        %1640 = vmatprep.subr.bf16.mxu0 0
        %1641 = vmatpush1.bf16.msra.mxu0 0
        %1642 = vmatprep.subr.bf16.mxu0 0
        %1643 = vmatpush1.bf16.msra.mxu0 0
        %1644 = vmatprep.subr.bf16.mxu0 0
        %1645 = vmatpush1.bf16.msra.mxu0 0
        %1646 = vmatprep.subr.bf16.mxu0 0
        %1647 = vmatpush1.bf16.msra.mxu0 0
        %1648 = vmatprep.mubr.bf16.mxu0 0
        %1649 = vmatmul.mubr.bf16.gmra.mrb[0].mxu0 %v1611
        %v1650 = vpop.f32.mrb[0].mxu0
        %v1651 = vadd.f32 0.0, %v1650
        %v1652 = vpop.f32.mrb[0].mxu0
        %v1653 = vpop.f32.mrb[0].mxu0
        %v1654 = vpop.f32.mrb[0].mxu0
        %1655 = vdwg.mxu0
        %v1656 = vpack.c.bf16 %v1651, %v1651
        %v1657 = vld [vmem:[#allocation7 + $0xc] sm:$0xc]
        %v1659 = vunpack.c.l.b16 %v1657
        %v1660 = vpack.c.b16 %v1659, %v1659
        %v1661 = vrot.slane %v1660, 2
        %v1663 = vsel %vm349, %v1656, 0
        %v1666 = vsel %vm472, %v1661, 0
        %1668 = vmatprep.subr.bf16.mxu0 0
        %1669 = vmatpush1.bf16.msra.mxu0 %v1666
        %1670 = vmatprep.subr.bf16.mxu0 0
        %1671 = vmatpush1.bf16.msra.mxu0 0
        %1672 = vmatprep.subr.bf16.mxu0 0
        %1673 = vmatpush1.bf16.msra.mxu0 0
        %1674 = vmatprep.subr.bf16.mxu0 0
        %1675 = vmatpush1.bf16.msra.mxu0 0
        %1676 = vmatprep.subr.bf16.mxu0 0
        %1677 = vmatpush1.bf16.msra.mxu0 0
        %1678 = vmatprep.subr.bf16.mxu0 0
        %1679 = vmatpush1.bf16.msra.mxu0 0
        %1680 = vmatprep.subr.bf16.mxu0 0
        %1681 = vmatpush1.bf16.msra.mxu0 0
        %1682 = vmatprep.subr.bf16.mxu0 0
        %1683 = vmatpush1.bf16.msra.mxu0 0
        %1684 = vmatprep.subr.bf16.mxu0 0
        %1685 = vmatpush1.bf16.msra.mxu0 0
        %1686 = vmatprep.subr.bf16.mxu0 0
        %1687 = vmatpush1.bf16.msra.mxu0 0
        %1688 = vmatprep.subr.bf16.mxu0 0
        %1689 = vmatpush1.bf16.msra.mxu0 0
        %1690 = vmatprep.subr.bf16.mxu0 0
        %1691 = vmatpush1.bf16.msra.mxu0 0
        %1692 = vmatprep.subr.bf16.mxu0 0
        %1693 = vmatpush1.bf16.msra.mxu0 0
        %1694 = vmatprep.subr.bf16.mxu0 0
        %1695 = vmatpush1.bf16.msra.mxu0 0
        %1696 = vmatprep.subr.bf16.mxu0 0
        %1697 = vmatpush1.bf16.msra.mxu0 0
        %1698 = vmatprep.subr.bf16.mxu0 0
        %1699 = vmatpush1.bf16.msra.mxu0 0
        %1700 = vmatprep.mubr.bf16.mxu0 0
        %1701 = vmatmul.mubr.bf16.gmra.mrb[0].mxu0 %v1663
        %v1702 = vpop.f32.mrb[0].mxu0
        %v1703 = vadd.f32 0.0, %v1702
        %v1704 = vpop.f32.mrb[0].mxu0
        %v1705 = vpop.f32.mrb[0].mxu0
        %v1706 = vpop.f32.mrb[0].mxu0
        %1707 = vdwg.mxu0
        %v1708 = vadd.f32 %v1536, %v1703
        %1709 = vst.msk [vmem:[%s268] sm:$0xff] %vm294, %v1708
        %s1710 = sand.u32 %s141, 1
        %s1711 = scalar_lea.sflag [#allocation4], %s1710
        %s1712 = sand.u32 %s141, 1
        %s1713 = smul.addr %s1712, 8
        %s1714 = scalar_lea.vmem [#allocation8], %s1713
        // Predicated region
        $region53: #{tpu_custom_call.1} parent=39 // pred_check
          %p1715 = pneg %p151
        $region54: #{tpu_custom_call.1} parent=39 // pred_check_branch
          %1717 = sbr.rel (%p1715) target = $region56
        $region55: #{tpu_custom_call.1} parent=39 // pred_region
          %s1719 = ssub.s32 128, 128
          %1720 = vsyncadd %s1711, %s1719
          %s1721 = smul.addr %s23, 128
          %s1722 = scalar_lea.hbm %s5, %s1721
          %s1724 = sshll.u32 %s1714, 4
          %s1725 = int_to_ptr.vmem [resolvable:$true] %s1724
          %1727 = dma.vmem_to_hbm [thread:$0]  %s1725, 128, %s1722, %s1711
        $region56: #{tpu_custom_call.1} parent=39 // pred_fallthru
          _
      $region40: #{tpu_custom_call.1} parent=5 // pred_fallthru
        _
      %p1728 = scmp.le.s32.totalorder 2, %s18
      // Predicated region
      $region57: #{tpu_custom_call.1} parent=5 // pred_check
        %p1729 = pneg %p1728
      $region58: #{tpu_custom_call.1} parent=5 // pred_check_branch
        %1731 = sbr.rel (%p1729) target = $region60
      $region59: #{tpu_custom_call.1} parent=5 // pred_region
        %s1732 = ssub.s32 %s18, 2
        // Predicated region
        $region61: #{tpu_custom_call.1} parent=59 // pred_check
          %p1733 = pneg %p157
        $region62: #{tpu_custom_call.1} parent=59 // pred_check_branch
          %1735 = sbr.rel (%p1733) target = $region64
        $region63: #{tpu_custom_call.1} parent=59 // pred_region
          %s1736 = sand.u32 %s142, 1
          %s1737 = scalar_lea.sflag [#allocation4], %s1736
          %s1738 = sand.u32 %s142, 1
          %s1739 = smul.addr %s1738, 8
          %s1740 = scalar_lea.vmem [#allocation8], %s1739
          %1741 = dma.done %s1737, 128
        $region64: #{tpu_custom_call.1} parent=59 // pred_fallthru
          _
      $region60: #{tpu_custom_call.1} parent=5 // pred_fallthru
        _
    $region6: #{tpu_custom_call.1} parent=1 // loop_footer
      %s22 = sadd.s32 1, %s18
    $region7: #{tpu_custom_call.1} parent=1 // loop_footer_branch
      %17 = sbr.rel target = $region3
    $region8: #{tpu_custom_call.1} parent=1 // loop_exit
      _
    %1742 = vsyncpa [#allocation3], 1
    %s1743 = scalar_lea.sflag [#allocation3], 1
    %1744 = vsyncpa %s1743, 1
    %1745 = vsyncpa [#allocation6], 1
    %1746 = vsyncpa [#allocation4], 1
    %s1747 = scalar_lea.sflag [#allocation4], 1
    %1748 = vsyncpa %s1747, 1

</llo_original>
